<compile_context>
chip_gen: v6e
topology: v6e:2x2x1
jax: 0.10.0
libtpu: 0.0.40
codegen_flags: <defaults>
</compile_context>

<pallas_src>
import functools

import jax
import jax.numpy as jnp
from jax.experimental import pallas as pl
from jax.experimental.pallas import tpu as pltpu

_LANE = 128


def _round_up(v, m):
    return ((v + m - 1) // m) * m


# ----------------------------------------------------------------------------
# Fused Pallas kernel: all GCN layers in one pallas_call.
#   grid = (num_layers [phase], NP // TM [row tile of A_hat])
# ----------------------------------------------------------------------------
def _fused_gcn_kernel(a_hbm, xw0_ref, w_ref, b_ref, o_ref,
                      a_vmem, xw_buf, h_buf, *, num_layers, tm):
    # a_hbm  : (NP, NP)   bf16 A_hat, memory_space=ANY (HBM)
    # xw0_ref: (NP, 128)  bf16 X @ W0, computed outside the kernel (resident)
    # w_ref  : (1,128,128) bf16 W_p (dummy zeros for p==0, never read)
    # b_ref  : (1,1,128)  f32  b_p (final layer: padded class cols = -1e30)
    # o_ref  : (TM, 128)  f32  output log-prob tile
    # a_vmem : (NP, NP)   bf16 resident adjacency scratch
    # xw_buf : (NP, 128)  bf16 scratch: H_{p-1} @ W_p of the current phase
    # h_buf  : (NP, 128)  bf16 scratch: previous-layer activations
    p = pl.program_id(0)  # layer / phase
    i = pl.program_id(1)  # A_hat row tile

    # (0) One-time setup at the very first grid step: DMA the full normalized
    #     adjacency HBM -> resident VMEM (used by every phase), and seed xw_buf
    #     with the hoisted layer-0 transform.
    @pl.when((p == 0) & (i == 0))
    def _():
        pltpu.sync_copy(a_hbm, a_vmem)
        xw_buf[...] = xw0_ref[...]

    # (1) Once per later phase (p >= 1): dense transform XW_p = H_{p-1} @ W_p
    #     into the resident scratch, reused by every row tile of this phase.
    @pl.when((p > 0) & (i == 0))
    def _():
        xw = jnp.dot(h_buf[...], w_ref[0], preferred_element_type=jnp.float32)
        xw_buf[...] = xw.astype(xw_buf.dtype)

    # (2) Aggregate one row stripe of the resident adjacency:
    #     A_hat[i*TM:(i+1)*TM, :] @ XW_p  (bf16 MXU inputs, f32 accumulation).
    row0 = pl.multiple_of(i * tm, tm)
    acc = jnp.dot(a_vmem[pl.ds(row0, tm), :], xw_buf[...],
                  preferred_element_type=jnp.float32)

    # (3) f32 epilogue: bias + ReLU for hidden layers (write back into the
    #     activation scratch); bias + log_softmax for the final layer.
    @pl.when(p < num_layers - 1)
    def _():
        h = jnp.maximum(acc + b_ref[0], 0.0)
        h_buf[pl.ds(row0, tm), :] = h.astype(h_buf.dtype)

    @pl.when(p == num_layers - 1)
    def _():
        h = acc + b_ref[0]  # padded class columns carry a -1e30 bias
        m = jnp.max(h, axis=-1, keepdims=True)
        s = h - m
        lse = jnp.log(jnp.sum(jnp.exp(s), axis=-1, keepdims=True))
        o_ref[...] = (s - lse).astype(o_ref.dtype)
    # No output write during non-final phases: the out index_map pins those
    # steps to block (0, 0), which the final phase overwrites before any
    # writeback (so no wasted VPU fills or HBM writebacks).


# ----------------------------------------------------------------------------
# Model wrapper (GCN3 forward, inference path)
# ----------------------------------------------------------------------------
def gcn3_forward(x, a_hat, weights, biases, *, tm=256):
    """x: [N, nfeat] f32, a_hat: [N, N] f32 normalized adjacency."""
    n, nfeat = x.shape
    num_layers = len(weights)
    nclass = weights[-1].shape[1]
    assert a_hat.shape == (n, n)
    assert num_layers >= 2  # GCN2/GCN3 always build >= 2 convs
    # TODO(synk): tile the feature axis for nhid / nclass > 128 lanes.
    assert all(w.shape[1] <= _LANE for w in weights)
    assert all(w.shape[0] <= _LANE for w in weights[1:])

    np_ = _round_up(n, tm)  # padded node count (rows/cols of A_hat)
    hp = _LANE              # padded hidden / class width (one lane tile)

    # ---- pad + cast operands: bf16 MXU inputs, f32 biases --------------------
    a_p = jnp.zeros((np_, np_), jnp.bfloat16).at[:n, :n].set(
        a_hat.astype(jnp.bfloat16))

    # Hoist the layer-0 transform X @ W0 out of the kernel (same bf16-in /
    # f32-acc numerics the kernel used); only the (NP, 128) result goes in.
    xw0 = jnp.dot(x.astype(jnp.bfloat16), weights[0].astype(jnp.bfloat16),
                  preferred_element_type=jnp.float32)
    xw0_p = jnp.zeros((np_, hp), jnp.bfloat16).at[
        :n, :weights[0].shape[1]].set(xw0.astype(jnp.bfloat16))

    # Stack layer 1..L-1 weights (index 0 is a never-read dummy so the layer
    # axis aligns with the phase index) and all biases.
    w_stack = jnp.zeros((num_layers, hp, hp), jnp.bfloat16)
    for li in range(1, num_layers):
        w = weights[li]
        w_stack = w_stack.at[li, :w.shape[0], :w.shape[1]].set(
            w.astype(jnp.bfloat16))

    b_stack = jnp.zeros((num_layers, 1, hp), jnp.float32)
    for li in range(num_layers):
        b = biases[li]
        if li == num_layers - 1:
            # Padded class columns -> -1e30 so exp() underflows to 0 in softmax.
            b_stack = b_stack.at[li].set(jnp.full((1, hp), -1e30, jnp.float32))
        b_stack = b_stack.at[li, 0, :b.shape[0]].set(b.astype(jnp.float32))

    grid = (num_layers, np_ // tm)

    def out_index_map(p, i):
        # Hidden phases revisit one dummy block (no writebacks); only the final
        # phase sweeps the real output tiles.
        return (jnp.where(p == num_layers - 1, i, 0), 0)

    in_specs = [
        pl.BlockSpec(memory_space=pl.ANY),                  # A_hat (HBM; DMA'd once)
        pl.BlockSpec((np_, hp), lambda p, i: (0, 0)),       # XW0 (resident)
        pl.BlockSpec((1, hp, hp), lambda p, i: (p, 0, 0)),  # W_p (phase-indexed)
        pl.BlockSpec((1, 1, hp), lambda p, i: (p, 0, 0)),   # b_p (phase-indexed)
    ]
    out_specs = pl.BlockSpec((tm, hp), out_index_map)

    kernel = functools.partial(_fused_gcn_kernel, num_layers=num_layers, tm=tm)

    # ---- VMEM budget: estimate actual footprint, cap at physical VMEM --------
    est = (
        np_ * np_ * 2            # resident A_hat scratch (single-buffered)
        + 2 * np_ * hp * 2       # XW0 input (default double-buffered)
        + 2 * hp * hp * 2        # W_p block (double-buffered)
        + 2 * hp * 4             # b_p block (double-buffered)
        + 2 * tm * hp * 4        # output block (double-buffered)
        + 2 * np_ * hp * 2       # xw_buf + h_buf scratches
    )
    try:
        phys_vmem = int(pltpu.get_tpu_info().vmem_capacity_bytes)
    except Exception:
        phys_vmem = 64 * 1024 * 1024  # conservative: v7x per-TC VMEM
    cap = int(phys_vmem * 0.9)
    vmem_limit = int(min(max(est + (8 << 20), 32 << 20), cap))

    out_padded = pl.pallas_call(
        kernel,
        out_shape=jax.ShapeDtypeStruct((np_, hp), jnp.float32),
        grid_spec=pltpu.PrefetchScalarGridSpec(
            num_scalar_prefetch=0,
            grid=grid,
            in_specs=in_specs,
            out_specs=out_specs,
            scratch_shapes=[
                pltpu.VMEM((np_, np_), jnp.bfloat16),  # resident A_hat
                pltpu.VMEM((np_, hp), jnp.bfloat16),   # XW of current layer
                pltpu.VMEM((np_, hp), jnp.bfloat16),   # previous-layer activations
            ],
        ),
        compiler_params=pltpu.CompilerParams(
            # Row tiles of phase p depend on ALL row tiles of phase p-1 via the
            # activation scratch -> both axes sequential on one core.
            # TODO(synk): core-parallel row-tile split for v7x's 2 TensorCores.
            dimension_semantics=("arbitrary", "arbitrary"),
            vmem_limit_bytes=vmem_limit,
        ),
    )(a_p, xw0_p, w_stack, b_stack)

    return out_padded[:n, :nclass]


# ----------------------------------------------------------------------------
# Glue: parameters, normalized adjacency, plain-JAX reference
# ----------------------------------------------------------------------------
def init_params(key, nfeat, nhid, nclass, num_layers):
    """Glorot-ish weights, zero biases (GCNConv.reset_parameters)."""
    dims = [nfeat] + [nhid] * (num_layers - 1) + [nclass]
    weights, biases = [], []
    for i in range(num_layers):
        key, wk = jax.random.split(key)
        fan_in, fan_out = dims[i], dims[i + 1]
        limit = jnp.sqrt(6.0 / (fan_in + fan_out))
        w = jax.random.uniform(wk, (fan_in, fan_out), jnp.float32, -limit, limit)
        weights.append(w)
        biases.append(jnp.zeros((fan_out,), jnp.float32))
    return weights, biases


def make_normalized_adj(key, n):
    """Random symmetric graph -> A_hat = D^{-1/2} (A + I) D^{-1/2}."""
    logits = jax.random.uniform(key, (n, n))
    a = (logits < 0.1).astype(jnp.float32)
    a = jnp.maximum(a, a.T)
    a = a + jnp.eye(n, dtype=jnp.float32)
    deg = jnp.sum(a, axis=1)
    d_inv_sqrt = 1.0 / jnp.sqrt(deg)
    return a * d_inv_sqrt[:, None] * d_inv_sqrt[None, :]


def _reference_forward(x, a_hat, weights, biases):
    h = x
    for w, b in zip(weights[:-1], biases[:-1]):
        h = jnp.maximum(a_hat @ (h @ w) + b, 0.0)
    h = a_hat @ (h @ weights[-1]) + biases[-1]
    return jax.nn.log_softmax(h, axis=-1)


if __name__ == "__main__":
    # Small shapes consistent with the module: N nodes, 3 GCN layers
    # (nfeat -> nhid -> nhid -> nclass).  N=200 exercises node padding (->256).
    N, NFEAT, NHID, NCLASS, NUM_LAYERS = 200, 16, 32, 8, 3

    key = jax.random.PRNGKey(0)
    kx, ka, kp = jax.random.split(key, 3)

    x = jax.random.normal(kx, (N, NFEAT), jnp.float32)
    a_hat = make_normalized_adj(ka, N)
    weights, biases = init_params(kp, NFEAT, NHID, NCLASS, NUM_LAYERS)

    out = gcn3_forward(x, a_hat, weights, biases)
    out = jax.block_until_ready(out)

    assert out.shape == (N, NCLASS)
    assert bool(jnp.all(jnp.isfinite(out)))

    # log_softmax rows sum to 1 in probability space.
    row_sums = jnp.exp(out).sum(axis=-1)
    assert bool(jnp.all(jnp.abs(row_sums - 1.0) < 1e-3))

    # Loose check vs the f32 reference (kernel feeds the MXU bf16 operands).
    ref = _reference_forward(x, a_hat, weights, biases)
    assert float(jnp.max(jnp.abs(out - ref))) < 0.1

    print("KERNEL_OK")
</pallas_src>

<mosaic_0001>
module attributes {stable_mosaic.version = 11 : i64} {
  func.func @_fused_gcn_kernel(%arg0: i32, %arg1: i32, %arg2: memref<256x256xbf16, #tpu.memory_space<any>>, %arg3: memref<256x128xbf16, #tpu.memory_space<vmem>>, %arg4: memref<1x128x128xbf16, #tpu.memory_space<vmem>>, %arg5: memref<1x1x128xf32, #tpu.memory_space<vmem>>, %arg6: memref<256x128xf32, #tpu.memory_space<vmem>>, %arg7: memref<256x256xbf16, #tpu.memory_space<vmem>>, %arg8: memref<256x128xbf16, #tpu.memory_space<vmem>>, %arg9: memref<256x128xbf16, #tpu.memory_space<vmem>>) attributes {dimension_semantics = [#tpu.dimension_semantics<arbitrary>, #tpu.dimension_semantics<arbitrary>], iteration_bounds = array<i64: 3, 1>, scalar_prefetch = 0 : i64, scratch_operands = 3 : i64, tpu.core_type = #tpu.core_type<tc>, window_params = [{}, {pipeline_mode = #tpu.pipeline_mode<synchronous>, transform_indices = @transform_1, window_bounds = array<i64: 256, 128>}, {transform_indices = @transform_2, window_bounds = array<i64: 1, 128, 128>}, {transform_indices = @transform_3, window_bounds = array<i64: 1, 1, 128>}, {transform_indices = @transform_4, window_bounds = array<i64: 256, 128>}]} {
    %c0_i32 = arith.constant 0 : i32
    %0 = arith.cmpi eq, %arg0, %c0_i32 : i32
    %c0_i32_0 = arith.constant 0 : i32
    %1 = arith.cmpi eq, %arg1, %c0_i32_0 : i32
    %2 = arith.andi %0, %1 : i1
    %3 = arith.extui %2 : i1 to i32
    %c0_i32_1 = arith.constant 0 : i32
    %4 = arith.cmpi ne, %3, %c0_i32_1 : i32
    scf.if %4 {
      "tpu.region"() ({
        %24 = tpu.sem_alloc : memref<!tpu.dma_semaphore, #tpu.memory_space<semaphore_mem>>
        tpu.enqueue_dma source(%arg2 : memref<256x256xbf16, #tpu.memory_space<any>>) target(%arg7 : memref<256x256xbf16, #tpu.memory_space<vmem>>) target_semaphore(%24 : memref<!tpu.dma_semaphore, #tpu.memory_space<semaphore_mem>>)
        tpu.wait_dma2 semaphore(%24 : memref<!tpu.dma_semaphore, #tpu.memory_space<semaphore_mem>>) src(%arg2 : memref<256x256xbf16, #tpu.memory_space<any>>) dst(%arg7 : memref<256x256xbf16, #tpu.memory_space<vmem>>)
        tpu.yield
      }) : () -> ()
      %c0_10 = arith.constant 0 : index
      %c0_11 = arith.constant 0 : index
      %22 = vector.load %arg3[%c0_10, %c0_11] : memref<256x128xbf16, #tpu.memory_space<vmem>>, vector<256x128xbf16>
      %c0_12 = arith.constant 0 : index
      %c0_13 = arith.constant 0 : index
      %23 = vector.load %arg8[%c0_12, %c0_13] : memref<256x128xbf16, #tpu.memory_space<vmem>>, vector<256x128xbf16>
      tpu.vector_store %arg8[%c0_12, %c0_13], %22 {strides = array<i32>} : memref<256x128xbf16, #tpu.memory_space<vmem>>, vector<256x128xbf16>,
    } else {
    }
    %c0_i32_2 = arith.constant 0 : i32
    %5 = arith.cmpi sgt, %arg0, %c0_i32_2 : i32
    %c0_i32_3 = arith.constant 0 : i32
    %6 = arith.cmpi eq, %arg1, %c0_i32_3 : i32
    %7 = arith.andi %5, %6 : i1
    %8 = arith.extui %7 : i1 to i32
    %c0_i32_4 = arith.constant 0 : i32
    %9 = arith.cmpi ne, %8, %c0_i32_4 : i32
    scf.if %9 {
      %c0_10 = arith.constant 0 : index
      %c0_11 = arith.constant 0 : index
      %22 = vector.load %arg9[%c0_10, %c0_11] : memref<256x128xbf16, #tpu.memory_space<vmem>>, vector<256x128xbf16>
      %c0_12 = arith.constant 0 : index
      %c0_13 = arith.constant 0 : index
      %c0_14 = arith.constant 0 : index
      %23 = vector.load %arg4[%c0_12, %c0_13, %c0_14] : memref<1x128x128xbf16, #tpu.memory_space<vmem>>, vector<1x128x128xbf16>
      %24 = vector.shape_cast %23 : vector<1x128x128xbf16> to vector<128x128xbf16>
      %cst_15 = arith.constant dense<0.000000e+00> : vector<256x128xf32>
      %25 = tpu.matmul %22, %24, %cst_15 {dimension_numbers = #tpu.dot_dimension_numbers<[1], [0], [0], [1], [0, 0, 1, 1], [], []>} : vector<256x128xbf16>, vector<128x128xbf16>, vector<256x128xf32> -> vector<256x128xf32>
      %26 = arith.truncf %25 : vector<256x128xf32> to vector<256x128xbf16>
      %c0_16 = arith.constant 0 : index
      %c0_17 = arith.constant 0 : index
      %27 = vector.load %arg8[%c0_16, %c0_17] : memref<256x128xbf16, #tpu.memory_space<vmem>>, vector<256x128xbf16>
      tpu.vector_store %arg8[%c0_16, %c0_17], %26 {strides = array<i32>} : memref<256x128xbf16, #tpu.memory_space<vmem>>, vector<256x128xbf16>,
    } else {
    }
    %c256_i32 = arith.constant 256 : i32
    %10 = arith.muli %arg1, %c256_i32 : i32
    %11 = tpu.assume_multiple %10, 256 : i32
    %12 = arith.index_cast %11 : i32 to index
    %c0 = arith.constant 0 : index
    %13 = vector.load %arg7[%12, %c0] : memref<256x256xbf16, #tpu.memory_space<vmem>>, vector<256x256xbf16>
    %c0_5 = arith.constant 0 : index
    %c0_6 = arith.constant 0 : index
    %14 = vector.load %arg8[%c0_5, %c0_6] : memref<256x128xbf16, #tpu.memory_space<vmem>>, vector<256x128xbf16>
    %cst = arith.constant dense<0.000000e+00> : vector<256x128xf32>
    %15 = tpu.matmul %13, %14, %cst {dimension_numbers = #tpu.dot_dimension_numbers<[1], [0], [0], [1], [0, 0, 1, 1], [], []>} : vector<256x256xbf16>, vector<256x128xbf16>, vector<256x128xf32> -> vector<256x128xf32>
    %c2_i32 = arith.constant 2 : i32
    %16 = arith.cmpi slt, %arg0, %c2_i32 : i32
    %17 = arith.extui %16 : i1 to i32
    %c0_i32_7 = arith.constant 0 : i32
    %18 = arith.cmpi ne, %17, %c0_i32_7 : i32
    scf.if %18 {
      %c0_10 = arith.constant 0 : index
      %c0_11 = arith.constant 0 : index
      %c0_12 = arith.constant 0 : index
      %22 = vector.load %arg5[%c0_10, %c0_11, %c0_12] : memref<1x1x128xf32, #tpu.memory_space<vmem>>, vector<1x1x128xf32>
      %23 = vector.shape_cast %22 : vector<1x1x128xf32> to vector<1x128xf32>
      %24 = vector.broadcast %23 : vector<1x128xf32> to vector<256x128xf32>
      %25 = arith.addf %15, %24 : vector<256x128xf32>
      %cst_13 = arith.constant 0.000000e+00 : f32
      %26 = vector.broadcast %cst_13 : f32 to vector<256x128xf32>
      %27 = arith.maximumf %25, %26 : vector<256x128xf32>
      %28 = arith.truncf %27 : vector<256x128xf32> to vector<256x128xbf16>
      %29 = arith.index_cast %11 : i32 to index
      %c0_14 = arith.constant 0 : index
      %30 = vector.load %arg9[%29, %c0_14] : memref<256x128xbf16, #tpu.memory_space<vmem>>, vector<256x128xbf16>
      tpu.vector_store %arg9[%29, %c0_14], %28 {strides = array<i32>} : memref<256x128xbf16, #tpu.memory_space<vmem>>, vector<256x128xbf16>,
    } else {
    }
    %c2_i32_8 = arith.constant 2 : i32
    %19 = arith.cmpi eq, %arg0, %c2_i32_8 : i32
    %20 = arith.extui %19 : i1 to i32
    %c0_i32_9 = arith.constant 0 : i32
    %21 = arith.cmpi ne, %20, %c0_i32_9 : i32
    scf.if %21 {
      %c0_10 = arith.constant 0 : index
      %c0_11 = arith.constant 0 : index
      %c0_12 = arith.constant 0 : index
      %22 = vector.load %arg5[%c0_10, %c0_11, %c0_12] : memref<1x1x128xf32, #tpu.memory_space<vmem>>, vector<1x1x128xf32>
      %23 = vector.shape_cast %22 : vector<1x1x128xf32> to vector<1x128xf32>
      %24 = vector.broadcast %23 : vector<1x128xf32> to vector<256x128xf32>
      %25 = arith.addf %15, %24 : vector<256x128xf32>
      %cst_13 = arith.constant dense<0xFF800000> : vector<256xf32>
      %26 = vector.multi_reduction <maximumf>, %25, %cst_13 [1] : vector<256x128xf32> to vector<256xf32>
      %27 = vector.shape_cast %26 : vector<256xf32> to vector<256x1xf32>
      %28 = vector.broadcast %27 : vector<256x1xf32> to vector<256x128xf32>
      %29 = arith.subf %25, %28 : vector<256x128xf32>
      %30 = math.exp %29 : vector<256x128xf32>
      %cst_14 = arith.constant dense<0.000000e+00> : vector<256xf32>
      %31 = vector.multi_reduction <add>, %30, %cst_14 [1] : vector<256x128xf32> to vector<256xf32>
      %32 = vector.shape_cast %31 : vector<256xf32> to vector<256x1xf32>
      %33 = math.log %32 : vector<256x1xf32>
      %34 = vector.broadcast %33 : vector<256x1xf32> to vector<256x128xf32>
      %35 = arith.subf %29, %34 : vector<256x128xf32>
      %c0_15 = arith.constant 0 : index
      %c0_16 = arith.constant 0 : index
      %36 = vector.load %arg6[%c0_15, %c0_16] : memref<256x128xf32, #tpu.memory_space<vmem>>, vector<256x128xf32>
      tpu.vector_store %arg6[%c0_15, %c0_16], %35 {strides = array<i32>} : memref<256x128xf32, #tpu.memory_space<vmem>>, vector<256x128xf32>,
    } else {
    }
    return
  }
  func.func @transform_1(%arg0: i32, %arg1: i32) -> (i32, i32) {
    %c0_i32 = arith.constant 0 : i32
    %c0_i32_0 = arith.constant 0 : i32
    %c0_i32_1 = arith.constant 0 : i32
    return %c0_i32, %c0_i32_0 : i32, i32
  }
  func.func @transform_2(%arg0: i32, %arg1: i32) -> (i32, i32, i32) {
    %c0_i32 = arith.constant 0 : i32
    %c0_i32_0 = arith.constant 0 : i32
    %c0_i32_1 = arith.constant 0 : i32
    return %arg0, %c0_i32, %c0_i32_0 : i32, i32, i32
  }
  func.func @transform_3(%arg0: i32, %arg1: i32) -> (i32, i32, i32) {
    %c0_i32 = arith.constant 0 : i32
    %c0_i32_0 = arith.constant 0 : i32
    %c0_i32_1 = arith.constant 0 : i32
    return %arg0, %c0_i32, %c0_i32_0 : i32, i32, i32
  }
  func.func @transform_4(%arg0: i32, %arg1: i32) -> (i32, i32) {
    %c2_i32 = arith.constant 2 : i32
    %0 = arith.cmpi eq, %arg0, %c2_i32 : i32
    %c0_i32 = arith.constant 0 : i32
    %1 = arith.select %0, %arg1, %c0_i32 : i32
    %c0_i32_0 = arith.constant 0 : i32
    %c0_i32_1 = arith.constant 0 : i32
    return %1, %c0_i32_0 : i32, i32
  }
}

</mosaic_0001>

<llo_original>
// kernel: tpu_custom_call.1
$region0: #{tpu_custom_call.1}
  #allocation0 [shape = 'u32[]', space=smem, size = 0x4, offset = 0x4, fixed_abs, tag = 'smem constant byte address 0x4 - core index']
  #allocation1 [shape = 'u32[144,128]{1,0:T(1,128)}', space=vmem, size = 0x12000, scoped, tag = 'internal scratch']
  #allocation2 [shape = 'bf16[256,256]{1,0:T(8,128)(2,1)}', space=vmem, size = 0x20000, scoped, tag = 'scratch operand']
  #allocation3 [shape = 'bf16[256,128]{1,0:T(8,128)(2,1)}', space=vmem, size = 0x10000, scoped, tag = 'scratch operand']
  #allocation4 [shape = 'bf16[256,128]{1,0:T(8,128)(2,1)}', space=vmem, size = 0x10000, scoped, tag = 'scratch operand']
  #allocation12 [shape = 's32[]', space=sflag, size = 0x4, offset = 0, fixed_abs, tag = 'sflag constant byte address 0x0 - dummy sync flag']
  #allocation13 [shape = 's32[]', space=sflag, size = 0x4, offset = 0, fixed_abs, tag = 'sflag constant byte address 0x0 - dummy sync flag']
  #allocation14 [shape = 'u32[]', space=smem, size = 0x4, offset = 0x44, fixed_abs, tag = 'smem constant byte address 0x44 - assertion arg 0']
  #allocation15 [shape = 'u32[]', space=smem, size = 0x4, offset = 0x48, fixed_abs, tag = 'smem constant byte address 0x48 - assertion arg 1']
  %s0 = inlined_call_operand.hbm [shape: bf16[256,256], index: 0, kind: input, shape index: {}]
  %s1 = inlined_call_operand.hbm [shape: bf16[256,128], index: 1, kind: input, shape index: {}]
  %s2 = inlined_call_operand.hbm [shape: bf16[3,128,128], index: 2, kind: input, shape index: {}]
  %s3 = inlined_call_operand.vmem [shape: f32[3,1,128], index: 3, kind: input, shape index: {}]
  %s4 = inlined_call_operand.hbm [shape: f32[256,128], index: 4, kind: output, shape index: {}]
  %s5 = sld [smem:[#allocation0]]
  $region74: #{tpu_custom_call.1} parent=0
    _
  %s7 = ssub.s32 1, %s5
  %s8 = scalar_select 0, %s7, %s5
  $region1: #{tpu_custom_call.1} parent=0
    #allocation5 [shape = 'u8[65536]{0}', space=vmem, size = 0x10000, scoped, tag = 'input window, operand 1, single buffered']
    #allocation6 [shape = 's32[2]{0}', space=sflag, size = 0x8, scoped, tag = 'scoped memory for tpu_custom_call.1']
    #allocation7 [shape = 's32[2]{0}', space=sflag, size = 0x8, scoped, tag = 'scoped memory for tpu_custom_call.1']
    #allocation8 [shape = 'u8[65536]{0}', space=vmem, size = 0x10000, scoped, tag = 'input window, operand 2']
    #allocation9 [shape = 's32[2]{0}', space=sflag, size = 0x8, scoped, tag = 'scoped memory for tpu_custom_call.1']
    #allocation10 [shape = 'u8[262144]{0}', space=vmem, size = 0x40000, scoped, tag = 'output window, operand 0']
    %9 = vsyncpa [#allocation6], 0
    %10 = vsyncpa [#allocation9], 0
    %s11 = scalar_lea.sflag [#allocation9], 1
    %12 = vsyncpa %s11, 0
    %13 = vsyncpa [#allocation7], 0
    %s14 = scalar_lea.sflag [#allocation7], 1
    %15 = vsyncpa %s14, 0
    loop: start=0, step=1, limit=5
    $region2: #{tpu_custom_call.1} parent=1 // loop_pre_header
      _
    $region3: #{tpu_custom_call.1} parent=1 // loop_header
      %s17 = sphi 0, %s21
      %p18 = scmp.ge.s32.totalorder %s17, 5
      %s24 = sphi 0, %s36
      %s25 = sphi 0, %s32
      %s26 = sphi 0, %s24
      %s27 = sphi 0, %s25
      %s28 = sphi 0, %s26
      %s29 = sphi 0, %s27
      %s37 = sphi 0, %s37
      %s39 = sphi 0, %s37
      %s40 = sphi 0, %s39
      %s54 = sphi 0, %s40
      %s60 = sphi 0, %s62
      %s63 = sphi 0, %s60
      %s64 = sphi 0, %s63
      %s80 = sphi 0, %s64
      %s86 = sphi 0, %s88
      %s89 = sphi 0, %s86
      %s90 = sphi 0, %s89
      %s106 = sphi 0, %s90
      %s116 = sphi 0, %s118
      %s119 = sphi 0, %s116
      %s120 = sphi 0, %s119
      %s136 = sphi 0, %s120
    $region4: #{tpu_custom_call.1} parent=1 // loop_header_branch
      %20 = sbr.rel (%p18) target = $region8
    $region5: #{tpu_custom_call.1} parent=1 // loop_body
      %s22 = ssub.s32 %s17, 1
      %s23 = ssub.s32 %s17, 2
      %s30 = sadd.s32 1, %s25
      %p31 = scmp.ge.s32.totalorder %s30, 1
      %s32 = scalar_select %p31, 0, %s30
      %s33 = sadd.s32 1, %s24
      %s34 = scalar_select %p31, %s33, %s24
      %p35 = scmp.ge.s32.totalorder %s34, 3
      %s36 = scalar_select %p35, 0, %s34
      %s38 = sadd.s32 %s37, 1
      %p41 = scmp.eq.s32.totalorder %s17, 2
      %p42 = scmp.ne.s32.totalorder %s37, %s39
      %p43 = scmp.eq.s32.totalorder %s17, 0
      %p44 = por %p42, %p43
      %p45 = scmp.ne.s32.totalorder %s37, %s39
      %p46 = scmp.eq.s32.totalorder %s22, 2
      %p47 = por %p45, %p46
      %p48 = scmp.ne.s32.totalorder %s39, %s40
      %p49 = scmp.eq.s32.totalorder %s22, 0
      %p50 = por %p48, %p49
      %p51 = scmp.ne.s32.totalorder %s39, %s40
      %p52 = scmp.eq.s32.totalorder %s23, 2
      %p53 = por %p51, %p52
      %p55 = scmp.ne.s32.totalorder %s40, %s54
      %p56 = scmp.eq.s32.totalorder %s23, 0
      %p57 = por %p55, %p56
      %s58 = ssub.s32 %s24, %s36
      %p59 = scmp.eq.s32.totalorder %s58, 0
      %s61 = sadd.s32 %s60, 1
      %s62 = scalar_select %p59, %s60, %s61
      %p65 = pneg %p59
      %p66 = scmp.eq.s32.totalorder %s17, 2
      %p67 = por %p65, %p66
      %p68 = scmp.ne.s32.totalorder %s60, %s63
      %p69 = scmp.eq.s32.totalorder %s17, 0
      %p70 = por %p68, %p69
      %p71 = scmp.ne.s32.totalorder %s60, %s63
      %p72 = scmp.eq.s32.totalorder %s22, 2
      %p73 = por %p71, %p72
      %p74 = scmp.ne.s32.totalorder %s63, %s64
      %p75 = scmp.eq.s32.totalorder %s22, 0
      %p76 = por %p74, %p75
      %p77 = scmp.ne.s32.totalorder %s63, %s64
      %p78 = scmp.eq.s32.totalorder %s23, 2
      %p79 = por %p77, %p78
      %p81 = scmp.ne.s32.totalorder %s64, %s80
      %p82 = scmp.eq.s32.totalorder %s23, 0
      %p83 = por %p81, %p82
      %s84 = ssub.s32 %s24, %s36
      %p85 = scmp.eq.s32.totalorder %s84, 0
      %s87 = sadd.s32 %s86, 1
      %s88 = scalar_select %p85, %s86, %s87
      %p91 = pneg %p85
      %p92 = scmp.eq.s32.totalorder %s17, 2
      %p93 = por %p91, %p92
      %p94 = scmp.ne.s32.totalorder %s86, %s89
      %p95 = scmp.eq.s32.totalorder %s17, 0
      %p96 = por %p94, %p95
      %p97 = scmp.ne.s32.totalorder %s86, %s89
      %p98 = scmp.eq.s32.totalorder %s22, 2
      %p99 = por %p97, %p98
      %p100 = scmp.ne.s32.totalorder %s89, %s90
      %p101 = scmp.eq.s32.totalorder %s22, 0
      %p102 = por %p100, %p101
      %p103 = scmp.ne.s32.totalorder %s89, %s90
      %p104 = scmp.eq.s32.totalorder %s23, 2
      %p105 = por %p103, %p104
      %p107 = scmp.ne.s32.totalorder %s90, %s106
      %p108 = scmp.eq.s32.totalorder %s23, 0
      %p109 = por %p107, %p108
      %p110 = scmp.eq.s32.totalorder %s24, 2
      %s111 = scalar_select %p110, %s25, 0
      %p112 = scmp.eq.s32.totalorder %s36, 2
      %s113 = scalar_select %p112, %s32, 0
      %s114 = ssub.s32 %s111, %s113
      %p115 = scmp.eq.s32.totalorder %s114, 0
      %s117 = sadd.s32 %s116, 1
      %s118 = scalar_select %p115, %s116, %s117
      %p121 = pneg %p115
      %p122 = scmp.eq.s32.totalorder %s17, 2
      %p123 = por %p121, %p122
      %p124 = scmp.ne.s32.totalorder %s116, %s119
      %p125 = scmp.eq.s32.totalorder %s17, 0
      %p126 = por %p124, %p125
      %p127 = scmp.ne.s32.totalorder %s116, %s119
      %p128 = scmp.eq.s32.totalorder %s22, 2
      %p129 = por %p127, %p128
      %p130 = scmp.ne.s32.totalorder %s119, %s120
      %p131 = scmp.eq.s32.totalorder %s22, 0
      %p132 = por %p130, %p131
      %p133 = scmp.ne.s32.totalorder %s119, %s120
      %p134 = scmp.eq.s32.totalorder %s23, 2
      %p135 = por %p133, %p134
      %p137 = scmp.ne.s32.totalorder %s120, %s136
      %p138 = scmp.eq.s32.totalorder %s23, 0
      %p139 = por %p137, %p138
      %p140 = scmp.le.s32.totalorder 1, %s17
      %p141 = scmp.lt.s32.totalorder %s17, 4
      %p142 = pnand %p140, %p141
      %p143 = pneg %p142
      // Predicated region
      $region9: #{tpu_custom_call.1} parent=5 // pred_check
        _
      $region10: #{tpu_custom_call.1} parent=5 // pred_check_branch
        %145 = sbr.rel (%p142) target = $region12
      $region11: #{tpu_custom_call.1} parent=5 // pred_region
        %s146 = ssub.s32 %s17, 1
        // Predicated region
        $region13: #{tpu_custom_call.1} parent=11 // pred_check
          %p147 = pneg %p50
        $region14: #{tpu_custom_call.1} parent=11 // pred_check_branch
          %149 = sbr.rel (%p147) target = $region16
        $region15: #{tpu_custom_call.1} parent=11 // pred_region
          %s151 = ssub.s32 2048, 2048
          %152 = vsyncadd [#allocation6], %s151
          %s153 = sshll.u32 [#allocation5], 4
          %s154 = int_to_ptr.vmem [resolvable:$true] %s153
          %159 = dma.hbm_to_vmem [thread:$0]  %s1, 2048, %s154, [#allocation6], 64, 64, 4
        $region16: #{tpu_custom_call.1} parent=11 // pred_fallthru
          _
      $region12: #{tpu_custom_call.1} parent=5 // pred_fallthru
        _
      %p160 = scmp.lt.s32.totalorder %s17, 3
      // Predicated region
      $region17: #{tpu_custom_call.1} parent=5 // pred_check
        %p161 = pneg %p160
      $region18: #{tpu_custom_call.1} parent=5 // pred_check_branch
        %163 = sbr.rel (%p161) target = $region20
      $region19: #{tpu_custom_call.1} parent=5 // pred_region
        // Predicated region
        $region21: #{tpu_custom_call.1} parent=19 // pred_check
          %p164 = pneg %p70
        $region22: #{tpu_custom_call.1} parent=19 // pred_check_branch
          %166 = sbr.rel (%p164) target = $region24
        $region23: #{tpu_custom_call.1} parent=19 // pred_region
          %s167 = sand.u32 %s60, 1
          %s168 = scalar_lea.sflag [#allocation9], %s167
          %s169 = sand.u32 %s60, 1
          %s170 = smul.addr %s169, 64
          %s171 = scalar_lea.vmem [#allocation8], %s170
          %s173 = ssub.s32 1024, 1024
          %174 = vsyncadd %s168, %s173
          %s175 = smul.addr %s24, 16
          %s176 = smul.addr %s175, 64
          %s177 = scalar_lea.hbm %s2, %s176
          %s178 = sshll.u32 %s171, 4
          %s179 = int_to_ptr.vmem [resolvable:$true] %s178
          %184 = dma.hbm_to_vmem [thread:$0]  %s177, 1024, %s179, %s168, 64, 64, 4
        $region24: #{tpu_custom_call.1} parent=19 // pred_fallthru
          _
        // Predicated region
        $region25: #{tpu_custom_call.1} parent=19 // pred_check
          %p185 = pneg %p96
        $region26: #{tpu_custom_call.1} parent=19 // pred_check_branch
          %187 = sbr.rel (%p185) target = $region28
        $region27: #{tpu_custom_call.1} parent=19 // pred_region
          %p188 = scmp.lt.s32.totalorder %s24, 2
          %s189 = scalar_select %p188, %s24, 2
          %s190 = scalar_lea.vmem %s3, %s189
        $region28: #{tpu_custom_call.1} parent=19 // pred_fallthru
          _
      $region20: #{tpu_custom_call.1} parent=5 // pred_fallthru
        _
      %p191 = scmp.le.s32.totalorder 1, %s17
      %p192 = scmp.lt.s32.totalorder %s17, 4
      %p193 = pnand %p191, %p192
      %p194 = pneg %p193
      // Predicated region
      $region29: #{tpu_custom_call.1} parent=5 // pred_check
        _
      $region30: #{tpu_custom_call.1} parent=5 // pred_check_branch
        %196 = sbr.rel (%p193) target = $region32
      $region31: #{tpu_custom_call.1} parent=5 // pred_region
        %s197 = ssub.s32 %s17, 1
        // Predicated region
        $region33: #{tpu_custom_call.1} parent=31 // pred_check
          %p198 = pneg %p50
        $region34: #{tpu_custom_call.1} parent=31 // pred_check_branch
          %200 = sbr.rel (%p198) target = $region36
        $region35: #{tpu_custom_call.1} parent=31 // pred_region
          %201 = dma.done [#allocation6], 2048
        $region36: #{tpu_custom_call.1} parent=31 // pred_fallthru
          _
        %s202 = sand.u32 %s63, 1
        %s203 = scalar_lea.sflag [#allocation9], %s202
        %s204 = sand.u32 %s63, 1
        %s205 = smul.addr %s204, 64
        %s206 = scalar_lea.vmem [#allocation8], %s205
        // Predicated region
        $region37: #{tpu_custom_call.1} parent=31 // pred_check
          %p207 = pneg %p76
        $region38: #{tpu_custom_call.1} parent=31 // pred_check_branch
          %209 = sbr.rel (%p207) target = $region40
        $region39: #{tpu_custom_call.1} parent=31 // pred_region
          %210 = dma.done %s203, 1024
        $region40: #{tpu_custom_call.1} parent=31 // pred_fallthru
          _
        %p211 = pneg %p50
        %p212 = pneg %p47
        %s213 = sand.u32 %s63, 1
        %s214 = scalar_lea.sflag [#allocation9], %s213
        %s215 = sand.u32 %s63, 1
        %s216 = smul.addr %s215, 64
        %s217 = scalar_lea.vmem [#allocation8], %s216
        %p218 = pneg %p76
        %p219 = pneg %p73
        %p220 = scmp.lt.s32.totalorder %s26, 2
        %s221 = scalar_select %p220, %s26, 2
        %s222 = scalar_lea.vmem %s3, %s221
        %p223 = pneg %p102
        %p224 = pneg %p99
        %p225 = pneg %p132
        %p226 = pneg %p129
        %s227 = sand.u32 %s119, 1
        %s228 = scalar_lea.sflag [#allocation7], %s227
        %s229 = sand.u32 %s119, 1
        %s230 = smul.addr %s229, 256
        %s231 = scalar_lea.vmem [#allocation10], %s230
        %p232 = scmp.lt.s32.totalorder %s26, 2
        %s233 = scalar_select %p232, %s26, 2
        %s234 = scalar_lea.vmem %s3, %s233
        %p235 = scmp.eq.s32.totalorder %s26, 2
        %s236 = scalar_select %p235, %s27, 0
        %s237 = smul.u32 32, %s236
        %p239 = scmp.eq.s32.totalorder %s26, 0
        %p240 = scmp.eq.s32.totalorder %s27, 0
        %p241 = pnand %p239, %p240
        %p242 = pneg %p241
        // Predicated region
        $region41: #{tpu_custom_call.1} parent=31 // pred_check
          _
        $region42: #{tpu_custom_call.1} parent=31 // pred_check_branch
          %244 = sbr.rel (%p241) target = $region44
        $region43: #{tpu_custom_call.1} parent=31 // pred_region
          $region45: #{tpu_custom_call.1} parent=43
            #allocation11 [shape = 's32[1]{0}', space=sflag, size = 0x4, scoped, tag = 'scoped memory for tpu_custom_call.1']
            // Predicated region
            $region46: #{tpu_custom_call.1} parent=45 // pred_check
              _
            $region47: #{tpu_custom_call.1} parent=45 // pred_check_branch
              %246 = sbr.rel target = $region49
            $region48: #{tpu_custom_call.1} parent=45 // pred_region
              %247 = sst [smem:[#allocation14]] [#allocation13]
              %248 = sst [smem:[#allocation15]] [#allocation12]
            $region49: #{tpu_custom_call.1} parent=45 // pred_fallthru
              _
            %250 = shalt.err (0)
            %s252 = sshll.u32 [#allocation2], 4
            %s253 = int_to_ptr.vmem [resolvable:$true] %s252
            %255 = dma.hbm_to_vmem [thread:$0]  %s0, 4096, %s253, [#allocation11]
            %s256 = smul.u32 4, 32
            %s257 = smul.u32 %s256, 2
            %s258 = sshll.u32 %s257, 4
            %259 = dma.done [#allocation11], %s258
          %v260 = vld [vmem:[#allocation5] sm:$0xf]
          %v261 = vld [vmem:[#allocation5 + $0x4] sm:$0xf]
          %v262 = vld [vmem:[#allocation5 + $0x8] sm:$0xf]
          %v263 = vld [vmem:[#allocation5 + $0xc] sm:$0xf]
          %v264 = vld [vmem:[#allocation5 + $0x10] sm:$0xf]
          %v265 = vld [vmem:[#allocation5 + $0x14] sm:$0xf]
          %v266 = vld [vmem:[#allocation5 + $0x18] sm:$0xf]
          %v267 = vld [vmem:[#allocation5 + $0x1c] sm:$0xf]
          %v268 = vld [vmem:[#allocation5 + $0x20] sm:$0xf]
          %v269 = vld [vmem:[#allocation5 + $0x24] sm:$0xf]
          %v270 = vld [vmem:[#allocation5 + $0x28] sm:$0xf]
          %v271 = vld [vmem:[#allocation5 + $0x2c] sm:$0xf]
          %v272 = vld [vmem:[#allocation5 + $0x30] sm:$0xf]
          %v273 = vld [vmem:[#allocation5 + $0x34] sm:$0xf]
          %v274 = vld [vmem:[#allocation5 + $0x38] sm:$0xf]
          %v275 = vld [vmem:[#allocation5 + $0x3c] sm:$0xf]
          %v276 = vld [vmem:[#allocation5 + $0x40] sm:$0xf]
          %v277 = vld [vmem:[#allocation5 + $0x44] sm:$0xf]
          %v278 = vld [vmem:[#allocation5 + $0x48] sm:$0xf]
          %v279 = vld [vmem:[#allocation5 + $0x4c] sm:$0xf]
          %v280 = vld [vmem:[#allocation5 + $0x50] sm:$0xf]
          %v281 = vld [vmem:[#allocation5 + $0x54] sm:$0xf]
          %v282 = vld [vmem:[#allocation5 + $0x58] sm:$0xf]
          %v283 = vld [vmem:[#allocation5 + $0x5c] sm:$0xf]
          %v284 = vld [vmem:[#allocation5 + $0x60] sm:$0xf]
          %v285 = vld [vmem:[#allocation5 + $0x64] sm:$0xf]
          %v286 = vld [vmem:[#allocation5 + $0x68] sm:$0xf]
          %v287 = vld [vmem:[#allocation5 + $0x6c] sm:$0xf]
          %v288 = vld [vmem:[#allocation5 + $0x70] sm:$0xf]
          %v289 = vld [vmem:[#allocation5 + $0x74] sm:$0xf]
          %v290 = vld [vmem:[#allocation5 + $0x78] sm:$0xf]
          %v291 = vld [vmem:[#allocation5 + $0x7c] sm:$0xf]
          %292 = vst [vmem:[#allocation3] sm:$0xf] %v260
          %293 = vst [vmem:[#allocation3 + $0x4] sm:$0xf] %v261
          %294 = vst [vmem:[#allocation3 + $0x8] sm:$0xf] %v262
          %295 = vst [vmem:[#allocation3 + $0xc] sm:$0xf] %v263
          %296 = vst [vmem:[#allocation3 + $0x10] sm:$0xf] %v264
          %297 = vst [vmem:[#allocation3 + $0x14] sm:$0xf] %v265
          %298 = vst [vmem:[#allocation3 + $0x18] sm:$0xf] %v266
          %299 = vst [vmem:[#allocation3 + $0x1c] sm:$0xf] %v267
          %300 = vst [vmem:[#allocation3 + $0x20] sm:$0xf] %v268
          %301 = vst [vmem:[#allocation3 + $0x24] sm:$0xf] %v269
          %302 = vst [vmem:[#allocation3 + $0x28] sm:$0xf] %v270
          %303 = vst [vmem:[#allocation3 + $0x2c] sm:$0xf] %v271
          %304 = vst [vmem:[#allocation3 + $0x30] sm:$0xf] %v272
          %305 = vst [vmem:[#allocation3 + $0x34] sm:$0xf] %v273
          %306 = vst [vmem:[#allocation3 + $0x38] sm:$0xf] %v274
          %307 = vst [vmem:[#allocation3 + $0x3c] sm:$0xf] %v275
          %308 = vst [vmem:[#allocation3 + $0x40] sm:$0xf] %v276
          %309 = vst [vmem:[#allocation3 + $0x44] sm:$0xf] %v277
          %310 = vst [vmem:[#allocation3 + $0x48] sm:$0xf] %v278
          %311 = vst [vmem:[#allocation3 + $0x4c] sm:$0xf] %v279
          %312 = vst [vmem:[#allocation3 + $0x50] sm:$0xf] %v280
          %313 = vst [vmem:[#allocation3 + $0x54] sm:$0xf] %v281
          %314 = vst [vmem:[#allocation3 + $0x58] sm:$0xf] %v282
          %315 = vst [vmem:[#allocation3 + $0x5c] sm:$0xf] %v283
          %316 = vst [vmem:[#allocation3 + $0x60] sm:$0xf] %v284
          %317 = vst [vmem:[#allocation3 + $0x64] sm:$0xf] %v285
          %318 = vst [vmem:[#allocation3 + $0x68] sm:$0xf] %v286
          %319 = vst [vmem:[#allocation3 + $0x6c] sm:$0xf] %v287
          %320 = vst [vmem:[#allocation3 + $0x70] sm:$0xf] %v288
          %321 = vst [vmem:[#allocation3 + $0x74] sm:$0xf] %v289
          %322 = vst [vmem:[#allocation3 + $0x78] sm:$0xf] %v290
          %323 = vst [vmem:[#allocation3 + $0x7c] sm:$0xf] %v291
        $region44: #{tpu_custom_call.1} parent=31 // pred_fallthru
          _
        %p324 = scmp.gt.s32.totalorder %s26, 0
        %p325 = pnand %p324, %p240
        %p326 = pneg %p325
        // Predicated region
        $region50: #{tpu_custom_call.1} parent=31 // pred_check
          _
        $region51: #{tpu_custom_call.1} parent=31 // pred_check_branch
          %328 = sbr.rel (%p325) target = $region53
        $region52: #{tpu_custom_call.1} parent=31 // pred_region
          %v329 = vld [vmem:[#allocation4] sm:$0xf]
          %v330 = vld [vmem:[#allocation4 + $0x4] sm:$0xf]
          %v331 = vld [vmem:[#allocation4 + $0x8] sm:$0xf]
          %v332 = vld [vmem:[#allocation4 + $0xc] sm:$0xf]
          %v333 = vld [vmem:[#allocation4 + $0x10] sm:$0xf]
          %v334 = vld [vmem:[#allocation4 + $0x14] sm:$0xf]
          %v335 = vld [vmem:[#allocation4 + $0x18] sm:$0xf]
          %v336 = vld [vmem:[#allocation4 + $0x1c] sm:$0xf]
          %v337 = vld [vmem:[#allocation4 + $0x20] sm:$0xf]
          %v338 = vld [vmem:[#allocation4 + $0x24] sm:$0xf]
          %v339 = vld [vmem:[#allocation4 + $0x28] sm:$0xf]
          %v340 = vld [vmem:[#allocation4 + $0x2c] sm:$0xf]
          %v341 = vld [vmem:[#allocation4 + $0x30] sm:$0xf]
          %v342 = vld [vmem:[#allocation4 + $0x34] sm:$0xf]
          %v343 = vld [vmem:[#allocation4 + $0x38] sm:$0xf]
          %v344 = vld [vmem:[#allocation4 + $0x3c] sm:$0xf]
          %v345 = vld [vmem:[#allocation4 + $0x40] sm:$0xf]
          %v346 = vld [vmem:[#allocation4 + $0x44] sm:$0xf]
          %v347 = vld [vmem:[#allocation4 + $0x48] sm:$0xf]
          %v348 = vld [vmem:[#allocation4 + $0x4c] sm:$0xf]
          %v349 = vld [vmem:[#allocation4 + $0x50] sm:$0xf]
          %v350 = vld [vmem:[#allocation4 + $0x54] sm:$0xf]
          %v351 = vld [vmem:[#allocation4 + $0x58] sm:$0xf]
          %v352 = vld [vmem:[#allocation4 + $0x5c] sm:$0xf]
          %v353 = vld [vmem:[#allocation4 + $0x60] sm:$0xf]
          %v354 = vld [vmem:[#allocation4 + $0x64] sm:$0xf]
          %v355 = vld [vmem:[#allocation4 + $0x68] sm:$0xf]
          %v356 = vld [vmem:[#allocation4 + $0x6c] sm:$0xf]
          %v357 = vld [vmem:[#allocation4 + $0x70] sm:$0xf]
          %v358 = vld [vmem:[#allocation4 + $0x74] sm:$0xf]
          %v359 = vld [vmem:[#allocation4 + $0x78] sm:$0xf]
          %v360 = vld [vmem:[#allocation4 + $0x7c] sm:$0xf]
          %v361 = vld [vmem:[%s206] sm:$0xf]
          %v362 = vld [vmem:[%s206 + $0x4] sm:$0xf]
          %v363 = vld [vmem:[%s206 + $0x8] sm:$0xf]
          %v364 = vld [vmem:[%s206 + $0xc] sm:$0xf]
          %v365 = vld [vmem:[%s206 + $0x10] sm:$0xf]
          %v366 = vld [vmem:[%s206 + $0x14] sm:$0xf]
          %v367 = vld [vmem:[%s206 + $0x18] sm:$0xf]
          %v368 = vld [vmem:[%s206 + $0x1c] sm:$0xf]
          %v369 = vld [vmem:[%s206 + $0x20] sm:$0xf]
          %v370 = vld [vmem:[%s206 + $0x24] sm:$0xf]
          %v371 = vld [vmem:[%s206 + $0x28] sm:$0xf]
          %v372 = vld [vmem:[%s206 + $0x2c] sm:$0xf]
          %v373 = vld [vmem:[%s206 + $0x30] sm:$0xf]
          %v374 = vld [vmem:[%s206 + $0x34] sm:$0xf]
          %v375 = vld [vmem:[%s206 + $0x38] sm:$0xf]
          %v376 = vld [vmem:[%s206 + $0x3c] sm:$0xf]
          %v409 = vunpack.c.l.b16 %v329
          %v410 = vunpack.c.l.b16 %v330
          %v411 = vunpack.c.l.b16 %v331
          %v412 = vunpack.c.l.b16 %v332
          %v413 = vunpack.c.l.b16 %v333
          %v414 = vunpack.c.l.b16 %v334
          %v415 = vunpack.c.l.b16 %v335
          %v416 = vunpack.c.l.b16 %v336
          %v417 = vunpack.c.l.b16 %v337
          %v418 = vunpack.c.l.b16 %v338
          %v419 = vunpack.c.l.b16 %v339
          %v420 = vunpack.c.l.b16 %v340
          %v421 = vunpack.c.l.b16 %v341
          %v422 = vunpack.c.l.b16 %v342
          %v423 = vunpack.c.l.b16 %v343
          %v424 = vunpack.c.l.b16 %v344
          %v425 = vunpack.c.l.b16 %v345
          %v426 = vunpack.c.l.b16 %v346
          %v427 = vunpack.c.l.b16 %v347
          %v428 = vunpack.c.l.b16 %v348
          %v429 = vunpack.c.l.b16 %v349
          %v430 = vunpack.c.l.b16 %v350
          %v431 = vunpack.c.l.b16 %v351
          %v432 = vunpack.c.l.b16 %v352
          %v433 = vunpack.c.l.b16 %v353
          %v434 = vunpack.c.l.b16 %v354
          %v435 = vunpack.c.l.b16 %v355
          %v436 = vunpack.c.l.b16 %v356
          %v437 = vunpack.c.l.b16 %v357
          %v438 = vunpack.c.l.b16 %v358
          %v439 = vunpack.c.l.b16 %v359
          %v440 = vunpack.c.l.b16 %v360
          %v441 = vpack.c.b16 %v410, %v409
          %v442 = vpack.c.b16 %v412, %v411
          %v443 = vpack.c.b16 %v414, %v413
          %v444 = vpack.c.b16 %v416, %v415
          %v445 = vpack.c.b16 %v418, %v417
          %v446 = vpack.c.b16 %v420, %v419
          %v447 = vpack.c.b16 %v422, %v421
          %v448 = vpack.c.b16 %v424, %v423
          %v449 = vpack.c.b16 %v426, %v425
          %v450 = vpack.c.b16 %v428, %v427
          %v451 = vpack.c.b16 %v430, %v429
          %v452 = vpack.c.b16 %v432, %v431
          %v453 = vpack.c.b16 %v434, %v433
          %v454 = vpack.c.b16 %v436, %v435
          %v455 = vpack.c.b16 %v438, %v437
          %v456 = vpack.c.b16 %v440, %v439
          %v489 = vunpack.c.l.b16 %v361
          %v490 = vunpack.c.l.b16 %v362
          %v491 = vunpack.c.l.b16 %v363
          %v492 = vunpack.c.l.b16 %v364
          %v493 = vunpack.c.l.b16 %v365
          %v494 = vunpack.c.l.b16 %v366
          %v495 = vunpack.c.l.b16 %v367
          %v496 = vunpack.c.l.b16 %v368
          %v497 = vunpack.c.l.b16 %v369
          %v498 = vunpack.c.l.b16 %v370
          %v499 = vunpack.c.l.b16 %v371
          %v500 = vunpack.c.l.b16 %v372
          %v501 = vunpack.c.l.b16 %v373
          %v502 = vunpack.c.l.b16 %v374
          %v503 = vunpack.c.l.b16 %v375
          %v504 = vunpack.c.l.b16 %v376
          %v505 = vpack.c.b16 %v490, %v489
          %v506 = vpack.c.b16 %v492, %v491
          %v507 = vpack.c.b16 %v494, %v493
          %v508 = vpack.c.b16 %v496, %v495
          %v509 = vpack.c.b16 %v498, %v497
          %v510 = vpack.c.b16 %v500, %v499
          %v511 = vpack.c.b16 %v502, %v501
          %v512 = vpack.c.b16 %v504, %v503
          %521 = vmatprep.subr.bf16.mxu0 0
          %522 = vmatpush1.bf16.msra.mxu0 %v512
          %523 = vmatprep.subr.bf16.mxu0 0
          %524 = vmatpush1.bf16.msra.mxu0 %v511
          %525 = vmatprep.subr.bf16.mxu0 0
          %526 = vmatpush1.bf16.msra.mxu0 %v510
          %527 = vmatprep.subr.bf16.mxu0 0
          %528 = vmatpush1.bf16.msra.mxu0 %v509
          %529 = vmatprep.subr.bf16.mxu0 0
          %530 = vmatpush1.bf16.msra.mxu0 %v508
          %531 = vmatprep.subr.bf16.mxu0 0
          %532 = vmatpush1.bf16.msra.mxu0 %v507
          %533 = vmatprep.subr.bf16.mxu0 0
          %534 = vmatpush1.bf16.msra.mxu0 %v506
          %535 = vmatprep.subr.bf16.mxu0 0
          %536 = vmatpush1.bf16.msra.mxu0 %v505
          %537 = vmatprep.subr.bf16.mxu0 0
          %538 = vmatpush2.bf16.msra.mxu0 0
          %539 = vmatprep.subr.bf16.mxu0 0
          %540 = vmatpush2.bf16.msra.mxu0 0
          %541 = vmatprep.subr.bf16.mxu0 0
          %542 = vmatpush2.bf16.msra.mxu0 0
          %543 = vmatprep.subr.bf16.mxu0 0
          %544 = vmatpush2.bf16.msra.mxu0 0
          %545 = vmatprep.subr.bf16.mxu0 0
          %546 = vmatpush2.bf16.msra.mxu0 0
          %547 = vmatprep.subr.bf16.mxu0 0
          %548 = vmatpush2.bf16.msra.mxu0 0
          %549 = vmatprep.subr.bf16.mxu0 0
          %550 = vmatpush2.bf16.msra.mxu0 0
          %551 = vmatprep.subr.bf16.mxu0 0
          %552 = vmatpush2.bf16.msra.mxu0 0
          %553 = vmatprep.mubr.bf16.mxu0 0
          %554 = vmatmul.mubr.bf16.gmra.mxu0 %v441
          %v555 = vpop.f32.mrf.mxu0
          %v556 = vadd.f32 0.0, %v555
          %v557 = vpop.f32.mrf.mxu0
          %v558 = vpop.f32.mrf.mxu0
          %v559 = vadd.f32 0.0, %v558
          %v560 = vpop.f32.mrf.mxu0
          %561 = vmatprep.mubr.bf16.mxu0 0
          %562 = vmatmul.mubr.bf16.gmra.mxu0 %v442
          %v563 = vpop.f32.mrf.mxu0
          %v564 = vadd.f32 0.0, %v563
          %v565 = vpop.f32.mrf.mxu0
          %v566 = vpop.f32.mrf.mxu0
          %v567 = vadd.f32 0.0, %v566
          %v568 = vpop.f32.mrf.mxu0
          %569 = vmatprep.mubr.bf16.mxu0 0
          %570 = vmatmul.mubr.bf16.gmra.mxu0 %v443
          %v571 = vpop.f32.mrf.mxu0
          %v572 = vadd.f32 0.0, %v571
          %v573 = vpop.f32.mrf.mxu0
          %v574 = vpop.f32.mrf.mxu0
          %v575 = vadd.f32 0.0, %v574
          %v576 = vpop.f32.mrf.mxu0
          %577 = vmatprep.mubr.bf16.mxu0 0
          %578 = vmatmul.mubr.bf16.gmra.mxu0 %v444
          %v579 = vpop.f32.mrf.mxu0
          %v580 = vadd.f32 0.0, %v579
          %v581 = vpop.f32.mrf.mxu0
          %v582 = vpop.f32.mrf.mxu0
          %v583 = vadd.f32 0.0, %v582
          %v584 = vpop.f32.mrf.mxu0
          %585 = vmatprep.mubr.bf16.mxu0 0
          %586 = vmatmul.mubr.bf16.gmra.mxu0 %v445
          %v587 = vpop.f32.mrf.mxu0
          %v588 = vadd.f32 0.0, %v587
          %v589 = vpop.f32.mrf.mxu0
          %v590 = vpop.f32.mrf.mxu0
          %v591 = vadd.f32 0.0, %v590
          %v592 = vpop.f32.mrf.mxu0
          %593 = vmatprep.mubr.bf16.mxu0 0
          %594 = vmatmul.mubr.bf16.gmra.mxu0 %v446
          %v595 = vpop.f32.mrf.mxu0
          %v596 = vadd.f32 0.0, %v595
          %v597 = vpop.f32.mrf.mxu0
          %v598 = vpop.f32.mrf.mxu0
          %v599 = vadd.f32 0.0, %v598
          %v600 = vpop.f32.mrf.mxu0
          %601 = vmatprep.mubr.bf16.mxu0 0
          %602 = vmatmul.mubr.bf16.gmra.mxu0 %v447
          %v603 = vpop.f32.mrf.mxu0
          %v604 = vadd.f32 0.0, %v603
          %v605 = vpop.f32.mrf.mxu0
          %v606 = vpop.f32.mrf.mxu0
          %v607 = vadd.f32 0.0, %v606
          %v608 = vpop.f32.mrf.mxu0
          %609 = vmatprep.mubr.bf16.mxu0 0
          %610 = vmatmul.mubr.bf16.gmra.mxu0 %v448
          %v611 = vpop.f32.mrf.mxu0
          %v612 = vadd.f32 0.0, %v611
          %v613 = vpop.f32.mrf.mxu0
          %v614 = vpop.f32.mrf.mxu0
          %v615 = vadd.f32 0.0, %v614
          %v616 = vpop.f32.mrf.mxu0
          %617 = vmatprep.mubr.bf16.mxu0 0
          %618 = vmatmul.mubr.bf16.gmra.mxu0 %v449
          %v619 = vpop.f32.mrf.mxu0
          %v620 = vadd.f32 0.0, %v619
          %v621 = vpop.f32.mrf.mxu0
          %v622 = vpop.f32.mrf.mxu0
          %v623 = vadd.f32 0.0, %v622
          %v624 = vpop.f32.mrf.mxu0
          %625 = vmatprep.mubr.bf16.mxu0 0
          %626 = vmatmul.mubr.bf16.gmra.mxu0 %v450
          %v627 = vpop.f32.mrf.mxu0
          %v628 = vadd.f32 0.0, %v627
          %v629 = vpop.f32.mrf.mxu0
          %v630 = vpop.f32.mrf.mxu0
          %v631 = vadd.f32 0.0, %v630
          %v632 = vpop.f32.mrf.mxu0
          %633 = vmatprep.mubr.bf16.mxu0 0
          %634 = vmatmul.mubr.bf16.gmra.mxu0 %v451
          %v635 = vpop.f32.mrf.mxu0
          %v636 = vadd.f32 0.0, %v635
          %v637 = vpop.f32.mrf.mxu0
          %v638 = vpop.f32.mrf.mxu0
          %v639 = vadd.f32 0.0, %v638
          %v640 = vpop.f32.mrf.mxu0
          %641 = vmatprep.mubr.bf16.mxu0 0
          %642 = vmatmul.mubr.bf16.gmra.mxu0 %v452
          %v643 = vpop.f32.mrf.mxu0
          %v644 = vadd.f32 0.0, %v643
          %v645 = vpop.f32.mrf.mxu0
          %v646 = vpop.f32.mrf.mxu0
          %v647 = vadd.f32 0.0, %v646
          %v648 = vpop.f32.mrf.mxu0
          %649 = vmatprep.mubr.bf16.mxu0 0
          %650 = vmatmul.mubr.bf16.gmra.mxu0 %v453
          %v651 = vpop.f32.mrf.mxu0
          %v652 = vadd.f32 0.0, %v651
          %v653 = vpop.f32.mrf.mxu0
          %v654 = vpop.f32.mrf.mxu0
          %v655 = vadd.f32 0.0, %v654
          %v656 = vpop.f32.mrf.mxu0
          %657 = vmatprep.mubr.bf16.mxu0 0
          %658 = vmatmul.mubr.bf16.gmra.mxu0 %v454
          %v659 = vpop.f32.mrf.mxu0
          %v660 = vadd.f32 0.0, %v659
          %v661 = vpop.f32.mrf.mxu0
          %v662 = vpop.f32.mrf.mxu0
          %v663 = vadd.f32 0.0, %v662
          %v664 = vpop.f32.mrf.mxu0
          %665 = vmatprep.mubr.bf16.mxu0 0
          %666 = vmatmul.mubr.bf16.gmra.mxu0 %v455
          %v667 = vpop.f32.mrf.mxu0
          %v668 = vadd.f32 0.0, %v667
          %v669 = vpop.f32.mrf.mxu0
          %v670 = vpop.f32.mrf.mxu0
          %v671 = vadd.f32 0.0, %v670
          %v672 = vpop.f32.mrf.mxu0
          %673 = vmatprep.mubr.bf16.mxu0 0
          %674 = vmatmul.mubr.bf16.gmra.mxu0 %v456
          %v675 = vpop.f32.mrf.mxu0
          %v676 = vadd.f32 0.0, %v675
          %v677 = vpop.f32.mrf.mxu0
          %v678 = vpop.f32.mrf.mxu0
          %v679 = vadd.f32 0.0, %v678
          %v680 = vpop.f32.mrf.mxu0
          %681 = vdwg.mxu0
          %v682 = vpack.c.bf16 %v559, %v556
          %v683 = vpack.c.bf16 %v567, %v564
          %v684 = vpack.c.bf16 %v575, %v572
          %v685 = vpack.c.bf16 %v583, %v580
          %v686 = vpack.c.bf16 %v591, %v588
          %v687 = vpack.c.bf16 %v599, %v596
          %v688 = vpack.c.bf16 %v607, %v604
          %v689 = vpack.c.bf16 %v615, %v612
          %v690 = vpack.c.bf16 %v623, %v620
          %v691 = vpack.c.bf16 %v631, %v628
          %v692 = vpack.c.bf16 %v639, %v636
          %v693 = vpack.c.bf16 %v647, %v644
          %v694 = vpack.c.bf16 %v655, %v652
          %v695 = vpack.c.bf16 %v663, %v660
          %v696 = vpack.c.bf16 %v671, %v668
          %v697 = vpack.c.bf16 %v679, %v676
          %v714 = vunpack.c.l.b16 %v682
          %v715 = vunpack.c.h.b16 %v682
          %v716 = vunpack.c.l.b16 %v683
          %v717 = vunpack.c.h.b16 %v683
          %v718 = vunpack.c.l.b16 %v684
          %v719 = vunpack.c.h.b16 %v684
          %v720 = vunpack.c.l.b16 %v685
          %v721 = vunpack.c.h.b16 %v685
          %v722 = vunpack.c.l.b16 %v686
          %v723 = vunpack.c.h.b16 %v686
          %v724 = vunpack.c.l.b16 %v687
          %v725 = vunpack.c.h.b16 %v687
          %v726 = vunpack.c.l.b16 %v688
          %v727 = vunpack.c.h.b16 %v688
          %v728 = vunpack.c.l.b16 %v689
          %v729 = vunpack.c.h.b16 %v689
          %v730 = vunpack.c.l.b16 %v690
          %v731 = vunpack.c.h.b16 %v690
          %v732 = vunpack.c.l.b16 %v691
          %v733 = vunpack.c.h.b16 %v691
          %v734 = vunpack.c.l.b16 %v692
          %v735 = vunpack.c.h.b16 %v692
          %v736 = vunpack.c.l.b16 %v693
          %v737 = vunpack.c.h.b16 %v693
          %v738 = vunpack.c.l.b16 %v694
          %v739 = vunpack.c.h.b16 %v694
          %v740 = vunpack.c.l.b16 %v695
          %v741 = vunpack.c.h.b16 %v695
          %v742 = vunpack.c.l.b16 %v696
          %v743 = vunpack.c.h.b16 %v696
          %v744 = vunpack.c.l.b16 %v697
          %v745 = vunpack.c.h.b16 %v697
          %v746 = vpack.c.b16 %v714, %v714
          %v747 = vpack.c.b16 %v715, %v715
          %v748 = vpack.c.b16 %v716, %v716
          %v749 = vpack.c.b16 %v717, %v717
          %v750 = vpack.c.b16 %v718, %v718
          %v751 = vpack.c.b16 %v719, %v719
          %v752 = vpack.c.b16 %v720, %v720
          %v753 = vpack.c.b16 %v721, %v721
          %v754 = vpack.c.b16 %v722, %v722
          %v755 = vpack.c.b16 %v723, %v723
          %v756 = vpack.c.b16 %v724, %v724
          %v757 = vpack.c.b16 %v725, %v725
          %v758 = vpack.c.b16 %v726, %v726
          %v759 = vpack.c.b16 %v727, %v727
          %v760 = vpack.c.b16 %v728, %v728
          %v761 = vpack.c.b16 %v729, %v729
          %v762 = vpack.c.b16 %v730, %v730
          %v763 = vpack.c.b16 %v731, %v731
          %v764 = vpack.c.b16 %v732, %v732
          %v765 = vpack.c.b16 %v733, %v733
          %v766 = vpack.c.b16 %v734, %v734
          %v767 = vpack.c.b16 %v735, %v735
          %v768 = vpack.c.b16 %v736, %v736
          %v769 = vpack.c.b16 %v737, %v737
          %v770 = vpack.c.b16 %v738, %v738
          %v771 = vpack.c.b16 %v739, %v739
          %v772 = vpack.c.b16 %v740, %v740
          %v773 = vpack.c.b16 %v741, %v741
          %v774 = vpack.c.b16 %v742, %v742
          %v775 = vpack.c.b16 %v743, %v743
          %v776 = vpack.c.b16 %v744, %v744
          %v777 = vpack.c.b16 %v745, %v745
          %810 = vst [vmem:[#allocation3] sm:$0xf] %v746
          %811 = vst [vmem:[#allocation3 + $0x4] sm:$0xf] %v747
          %812 = vst [vmem:[#allocation3 + $0x8] sm:$0xf] %v748
          %813 = vst [vmem:[#allocation3 + $0xc] sm:$0xf] %v749
          %814 = vst [vmem:[#allocation3 + $0x10] sm:$0xf] %v750
          %815 = vst [vmem:[#allocation3 + $0x14] sm:$0xf] %v751
          %816 = vst [vmem:[#allocation3 + $0x18] sm:$0xf] %v752
          %817 = vst [vmem:[#allocation3 + $0x1c] sm:$0xf] %v753
          %818 = vst [vmem:[#allocation3 + $0x20] sm:$0xf] %v754
          %819 = vst [vmem:[#allocation3 + $0x24] sm:$0xf] %v755
          %820 = vst [vmem:[#allocation3 + $0x28] sm:$0xf] %v756
          %821 = vst [vmem:[#allocation3 + $0x2c] sm:$0xf] %v757
          %822 = vst [vmem:[#allocation3 + $0x30] sm:$0xf] %v758
          %823 = vst [vmem:[#allocation3 + $0x34] sm:$0xf] %v759
          %824 = vst [vmem:[#allocation3 + $0x38] sm:$0xf] %v760
          %825 = vst [vmem:[#allocation3 + $0x3c] sm:$0xf] %v761
          %826 = vst [vmem:[#allocation3 + $0x40] sm:$0xf] %v762
          %827 = vst [vmem:[#allocation3 + $0x44] sm:$0xf] %v763
          %828 = vst [vmem:[#allocation3 + $0x48] sm:$0xf] %v764
          %829 = vst [vmem:[#allocation3 + $0x4c] sm:$0xf] %v765
          %830 = vst [vmem:[#allocation3 + $0x50] sm:$0xf] %v766
          %831 = vst [vmem:[#allocation3 + $0x54] sm:$0xf] %v767
          %832 = vst [vmem:[#allocation3 + $0x58] sm:$0xf] %v768
          %833 = vst [vmem:[#allocation3 + $0x5c] sm:$0xf] %v769
          %834 = vst [vmem:[#allocation3 + $0x60] sm:$0xf] %v770
          %835 = vst [vmem:[#allocation3 + $0x64] sm:$0xf] %v771
          %836 = vst [vmem:[#allocation3 + $0x68] sm:$0xf] %v772
          %837 = vst [vmem:[#allocation3 + $0x6c] sm:$0xf] %v773
          %838 = vst [vmem:[#allocation3 + $0x70] sm:$0xf] %v774
          %839 = vst [vmem:[#allocation3 + $0x74] sm:$0xf] %v775
          %840 = vst [vmem:[#allocation3 + $0x78] sm:$0xf] %v776
          %841 = vst [vmem:[#allocation3 + $0x7c] sm:$0xf] %v777
        $region53: #{tpu_custom_call.1} parent=31 // pred_fallthru
          _
        %s842 = smul.u32 %s27, 256
        %s843 = sshra.s32 %s842, 3
        %s844 = sand.u32 %s842, 7
        %s845 = smul.u32 %s843, 2
        %s846 = smul.addr %s845, 4
        %s847 = scalar_lea.vmem [#allocation2], %s846
        %v848 = vld [vmem:[%s847] sm:$0xff]
        %v849 = vld [vmem:[%s847 + $0x8] sm:$0xff]
        %v850 = vld [vmem:[%s847 + $0x10] sm:$0xff]
        %v851 = vld [vmem:[%s847 + $0x18] sm:$0xff]
        %v852 = vld [vmem:[%s847 + $0x20] sm:$0xff]
        %v853 = vld [vmem:[%s847 + $0x28] sm:$0xff]
        %v854 = vld [vmem:[%s847 + $0x30] sm:$0xff]
        %v855 = vld [vmem:[%s847 + $0x38] sm:$0xff]
        %v856 = vld [vmem:[%s847 + $0x40] sm:$0xff]
        %v857 = vld [vmem:[%s847 + $0x48] sm:$0xff]
        %v858 = vld [vmem:[%s847 + $0x50] sm:$0xff]
        %v859 = vld [vmem:[%s847 + $0x58] sm:$0xff]
        %v860 = vld [vmem:[%s847 + $0x60] sm:$0xff]
        %v861 = vld [vmem:[%s847 + $0x68] sm:$0xff]
        %v862 = vld [vmem:[%s847 + $0x70] sm:$0xff]
        %v863 = vld [vmem:[%s847 + $0x78] sm:$0xff]
        %v864 = vld [vmem:[%s847 + $0x80] sm:$0xff]
        %v865 = vld [vmem:[%s847 + $0x88] sm:$0xff]
        %v866 = vld [vmem:[%s847 + $0x90] sm:$0xff]
        %v867 = vld [vmem:[%s847 + $0x98] sm:$0xff]
        %v868 = vld [vmem:[%s847 + $0xa0] sm:$0xff]
        %v869 = vld [vmem:[%s847 + $0xa8] sm:$0xff]
        %v870 = vld [vmem:[%s847 + $0xb0] sm:$0xff]
        %v871 = vld [vmem:[%s847 + $0xb8] sm:$0xff]
        %v872 = vld [vmem:[%s847 + $0xc0] sm:$0xff]
        %v873 = vld [vmem:[%s847 + $0xc8] sm:$0xff]
        %v874 = vld [vmem:[%s847 + $0xd0] sm:$0xff]
        %v875 = vld [vmem:[%s847 + $0xd8] sm:$0xff]
        %v876 = vld [vmem:[%s847 + $0xe0] sm:$0xff]
        %v877 = vld [vmem:[%s847 + $0xe8] sm:$0xff]
        %v878 = vld [vmem:[%s847 + $0xf0] sm:$0xff]
        %v879 = vld [vmem:[%s847 + $0xf8] sm:$0xff]
        %v880 = vld [vmem:[#allocation3] sm:$0xf]
        %v881 = vld [vmem:[#allocation3 + $0x4] sm:$0xf]
        %v882 = vld [vmem:[#allocation3 + $0x8] sm:$0xf]
        %v883 = vld [vmem:[#allocation3 + $0xc] sm:$0xf]
        %v884 = vld [vmem:[#allocation3 + $0x10] sm:$0xf]
        %v885 = vld [vmem:[#allocation3 + $0x14] sm:$0xf]
        %v886 = vld [vmem:[#allocation3 + $0x18] sm:$0xf]
        %v887 = vld [vmem:[#allocation3 + $0x1c] sm:$0xf]
        %v888 = vld [vmem:[#allocation3 + $0x20] sm:$0xf]
        %v889 = vld [vmem:[#allocation3 + $0x24] sm:$0xf]
        %v890 = vld [vmem:[#allocation3 + $0x28] sm:$0xf]
        %v891 = vld [vmem:[#allocation3 + $0x2c] sm:$0xf]
        %v892 = vld [vmem:[#allocation3 + $0x30] sm:$0xf]
        %v893 = vld [vmem:[#allocation3 + $0x34] sm:$0xf]
        %v894 = vld [vmem:[#allocation3 + $0x38] sm:$0xf]
        %v895 = vld [vmem:[#allocation3 + $0x3c] sm:$0xf]
        %v896 = vld [vmem:[#allocation3 + $0x40] sm:$0xf]
        %v897 = vld [vmem:[#allocation3 + $0x44] sm:$0xf]
        %v898 = vld [vmem:[#allocation3 + $0x48] sm:$0xf]
        %v899 = vld [vmem:[#allocation3 + $0x4c] sm:$0xf]
        %v900 = vld [vmem:[#allocation3 + $0x50] sm:$0xf]
        %v901 = vld [vmem:[#allocation3 + $0x54] sm:$0xf]
        %v902 = vld [vmem:[#allocation3 + $0x58] sm:$0xf]
        %v903 = vld [vmem:[#allocation3 + $0x5c] sm:$0xf]
        %v904 = vld [vmem:[#allocation3 + $0x60] sm:$0xf]
        %v905 = vld [vmem:[#allocation3 + $0x64] sm:$0xf]
        %v906 = vld [vmem:[#allocation3 + $0x68] sm:$0xf]
        %v907 = vld [vmem:[#allocation3 + $0x6c] sm:$0xf]
        %v908 = vld [vmem:[#allocation3 + $0x70] sm:$0xf]
        %v909 = vld [vmem:[#allocation3 + $0x74] sm:$0xf]
        %v910 = vld [vmem:[#allocation3 + $0x78] sm:$0xf]
        %v911 = vld [vmem:[#allocation3 + $0x7c] sm:$0xf]
        %v944 = vunpack.c.l.b16 %v848
        %v945 = vunpack.c.h.b16 %v848
        %v946 = vunpack.c.l.b16 %v849
        %v947 = vunpack.c.h.b16 %v849
        %v948 = vunpack.c.l.b16 %v850
        %v949 = vunpack.c.h.b16 %v850
        %v950 = vunpack.c.l.b16 %v851
        %v951 = vunpack.c.h.b16 %v851
        %v952 = vunpack.c.l.b16 %v852
        %v953 = vunpack.c.h.b16 %v852
        %v954 = vunpack.c.l.b16 %v853
        %v955 = vunpack.c.h.b16 %v853
        %v956 = vunpack.c.l.b16 %v854
        %v957 = vunpack.c.h.b16 %v854
        %v958 = vunpack.c.l.b16 %v855
        %v959 = vunpack.c.h.b16 %v855
        %v960 = vunpack.c.l.b16 %v856
        %v961 = vunpack.c.h.b16 %v856
        %v962 = vunpack.c.l.b16 %v857
        %v963 = vunpack.c.h.b16 %v857
        %v964 = vunpack.c.l.b16 %v858
        %v965 = vunpack.c.h.b16 %v858
        %v966 = vunpack.c.l.b16 %v859
        %v967 = vunpack.c.h.b16 %v859
        %v968 = vunpack.c.l.b16 %v860
        %v969 = vunpack.c.h.b16 %v860
        %v970 = vunpack.c.l.b16 %v861
        %v971 = vunpack.c.h.b16 %v861
        %v972 = vunpack.c.l.b16 %v862
        %v973 = vunpack.c.h.b16 %v862
        %v974 = vunpack.c.l.b16 %v863
        %v975 = vunpack.c.h.b16 %v863
        %v976 = vunpack.c.l.b16 %v864
        %v977 = vunpack.c.h.b16 %v864
        %v978 = vunpack.c.l.b16 %v865
        %v979 = vunpack.c.h.b16 %v865
        %v980 = vunpack.c.l.b16 %v866
        %v981 = vunpack.c.h.b16 %v866
        %v982 = vunpack.c.l.b16 %v867
        %v983 = vunpack.c.h.b16 %v867
        %v984 = vunpack.c.l.b16 %v868
        %v985 = vunpack.c.h.b16 %v868
        %v986 = vunpack.c.l.b16 %v869
        %v987 = vunpack.c.h.b16 %v869
        %v988 = vunpack.c.l.b16 %v870
        %v989 = vunpack.c.h.b16 %v870
        %v990 = vunpack.c.l.b16 %v871
        %v991 = vunpack.c.h.b16 %v871
        %v992 = vunpack.c.l.b16 %v872
        %v993 = vunpack.c.h.b16 %v872
        %v994 = vunpack.c.l.b16 %v873
        %v995 = vunpack.c.h.b16 %v873
        %v996 = vunpack.c.l.b16 %v874
        %v997 = vunpack.c.h.b16 %v874
        %v998 = vunpack.c.l.b16 %v875
        %v999 = vunpack.c.h.b16 %v875
        %v1000 = vunpack.c.l.b16 %v876
        %v1001 = vunpack.c.h.b16 %v876
        %v1002 = vunpack.c.l.b16 %v877
        %v1003 = vunpack.c.h.b16 %v877
        %v1004 = vunpack.c.l.b16 %v878
        %v1005 = vunpack.c.h.b16 %v878
        %v1006 = vunpack.c.l.b16 %v879
        %v1007 = vunpack.c.h.b16 %v879
        %v1008 = vpack.c.b16 %v946, %v944
        %v1009 = vpack.c.b16 %v947, %v945
        %v1010 = vpack.c.b16 %v950, %v948
        %v1011 = vpack.c.b16 %v951, %v949
        %v1012 = vpack.c.b16 %v954, %v952
        %v1013 = vpack.c.b16 %v955, %v953
        %v1014 = vpack.c.b16 %v958, %v956
        %v1015 = vpack.c.b16 %v959, %v957
        %v1016 = vpack.c.b16 %v962, %v960
        %v1017 = vpack.c.b16 %v963, %v961
        %v1018 = vpack.c.b16 %v966, %v964
        %v1019 = vpack.c.b16 %v967, %v965
        %v1020 = vpack.c.b16 %v970, %v968
        %v1021 = vpack.c.b16 %v971, %v969
        %v1022 = vpack.c.b16 %v974, %v972
        %v1023 = vpack.c.b16 %v975, %v973
        %v1024 = vpack.c.b16 %v978, %v976
        %v1025 = vpack.c.b16 %v979, %v977
        %v1026 = vpack.c.b16 %v982, %v980
        %v1027 = vpack.c.b16 %v983, %v981
        %v1028 = vpack.c.b16 %v986, %v984
        %v1029 = vpack.c.b16 %v987, %v985
        %v1030 = vpack.c.b16 %v990, %v988
        %v1031 = vpack.c.b16 %v991, %v989
        %v1032 = vpack.c.b16 %v994, %v992
        %v1033 = vpack.c.b16 %v995, %v993
        %v1034 = vpack.c.b16 %v998, %v996
        %v1035 = vpack.c.b16 %v999, %v997
        %v1036 = vpack.c.b16 %v1002, %v1000
        %v1037 = vpack.c.b16 %v1003, %v1001
        %v1038 = vpack.c.b16 %v1006, %v1004
        %v1039 = vpack.c.b16 %v1007, %v1005
        %v1104 = vunpack.c.l.b16 %v880
        %v1105 = vunpack.c.l.b16 %v881
        %v1106 = vunpack.c.l.b16 %v882
        %v1107 = vunpack.c.l.b16 %v883
        %v1108 = vunpack.c.l.b16 %v884
        %v1109 = vunpack.c.l.b16 %v885
        %v1110 = vunpack.c.l.b16 %v886
        %v1111 = vunpack.c.l.b16 %v887
        %v1112 = vunpack.c.l.b16 %v888
        %v1113 = vunpack.c.l.b16 %v889
        %v1114 = vunpack.c.l.b16 %v890
        %v1115 = vunpack.c.l.b16 %v891
        %v1116 = vunpack.c.l.b16 %v892
        %v1117 = vunpack.c.l.b16 %v893
        %v1118 = vunpack.c.l.b16 %v894
        %v1119 = vunpack.c.l.b16 %v895
        %v1120 = vunpack.c.l.b16 %v896
        %v1121 = vunpack.c.l.b16 %v897
        %v1122 = vunpack.c.l.b16 %v898
        %v1123 = vunpack.c.l.b16 %v899
        %v1124 = vunpack.c.l.b16 %v900
        %v1125 = vunpack.c.l.b16 %v901
        %v1126 = vunpack.c.l.b16 %v902
        %v1127 = vunpack.c.l.b16 %v903
        %v1128 = vunpack.c.l.b16 %v904
        %v1129 = vunpack.c.l.b16 %v905
        %v1130 = vunpack.c.l.b16 %v906
        %v1131 = vunpack.c.l.b16 %v907
        %v1132 = vunpack.c.l.b16 %v908
        %v1133 = vunpack.c.l.b16 %v909
        %v1134 = vunpack.c.l.b16 %v910
        %v1135 = vunpack.c.l.b16 %v911
        %v1136 = vpack.c.b16 %v1105, %v1104
        %v1137 = vpack.c.b16 %v1107, %v1106
        %v1138 = vpack.c.b16 %v1109, %v1108
        %v1139 = vpack.c.b16 %v1111, %v1110
        %v1140 = vpack.c.b16 %v1113, %v1112
        %v1141 = vpack.c.b16 %v1115, %v1114
        %v1142 = vpack.c.b16 %v1117, %v1116
        %v1143 = vpack.c.b16 %v1119, %v1118
        %v1144 = vpack.c.b16 %v1121, %v1120
        %v1145 = vpack.c.b16 %v1123, %v1122
        %v1146 = vpack.c.b16 %v1125, %v1124
        %v1147 = vpack.c.b16 %v1127, %v1126
        %v1148 = vpack.c.b16 %v1129, %v1128
        %v1149 = vpack.c.b16 %v1131, %v1130
        %v1150 = vpack.c.b16 %v1133, %v1132
        %v1151 = vpack.c.b16 %v1135, %v1134
        %1168 = vmatprep.subr.bf16.mxu0 0
        %1169 = vmatpush1.bf16.msra.mxu0 %v1143
        %1170 = vmatprep.subr.bf16.mxu0 0
        %1171 = vmatpush1.bf16.msra.mxu0 %v1142
        %1172 = vmatprep.subr.bf16.mxu0 0
        %1173 = vmatpush1.bf16.msra.mxu0 %v1141
        %1174 = vmatprep.subr.bf16.mxu0 0
        %1175 = vmatpush1.bf16.msra.mxu0 %v1140
        %1176 = vmatprep.subr.bf16.mxu0 0
        %1177 = vmatpush1.bf16.msra.mxu0 %v1139
        %1178 = vmatprep.subr.bf16.mxu0 0
        %1179 = vmatpush1.bf16.msra.mxu0 %v1138
        %1180 = vmatprep.subr.bf16.mxu0 0
        %1181 = vmatpush1.bf16.msra.mxu0 %v1137
        %1182 = vmatprep.subr.bf16.mxu0 0
        %1183 = vmatpush1.bf16.msra.mxu0 %v1136
        %1184 = vmatprep.subr.bf16.mxu0 0
        %1185 = vmatpush2.bf16.msra.mxu0 %v1151
        %1186 = vmatprep.subr.bf16.mxu0 0
        %1187 = vmatpush2.bf16.msra.mxu0 %v1150
        %1188 = vmatprep.subr.bf16.mxu0 0
        %1189 = vmatpush2.bf16.msra.mxu0 %v1149
        %1190 = vmatprep.subr.bf16.mxu0 0
        %1191 = vmatpush2.bf16.msra.mxu0 %v1148
        %1192 = vmatprep.subr.bf16.mxu0 0
        %1193 = vmatpush2.bf16.msra.mxu0 %v1147
        %1194 = vmatprep.subr.bf16.mxu0 0
        %1195 = vmatpush2.bf16.msra.mxu0 %v1146
        %1196 = vmatprep.subr.bf16.mxu0 0
        %1197 = vmatpush2.bf16.msra.mxu0 %v1145
        %1198 = vmatprep.subr.bf16.mxu0 0
        %1199 = vmatpush2.bf16.msra.mxu0 %v1144
        %1200 = vmatprep.mubr.bf16.mxu0 %v1009
        %1201 = vmatmul.mubr.bf16.gmra.mxu0 %v1008
        %v1202 = vpop.f32.mrf.mxu0
        %v1203 = vadd.f32 0.0, %v1202
        %v1204 = vpop.f32.mrf.mxu0
        %v1205 = vpop.f32.mrf.mxu0
        %v1206 = vadd.f32 0.0, %v1205
        %v1207 = vpop.f32.mrf.mxu0
        %1208 = vmatprep.mubr.bf16.mxu0 %v1011
        %1209 = vmatmul.mubr.bf16.gmra.mxu0 %v1010
        %v1210 = vpop.f32.mrf.mxu0
        %v1211 = vadd.f32 0.0, %v1210
        %v1212 = vpop.f32.mrf.mxu0
        %v1213 = vpop.f32.mrf.mxu0
        %v1214 = vadd.f32 0.0, %v1213
        %v1215 = vpop.f32.mrf.mxu0
        %1216 = vmatprep.mubr.bf16.mxu0 %v1013
        %1217 = vmatmul.mubr.bf16.gmra.mxu0 %v1012
        %v1218 = vpop.f32.mrf.mxu0
        %v1219 = vadd.f32 0.0, %v1218
        %v1220 = vpop.f32.mrf.mxu0
        %v1221 = vpop.f32.mrf.mxu0
        %v1222 = vadd.f32 0.0, %v1221
        %v1223 = vpop.f32.mrf.mxu0
        %1224 = vmatprep.mubr.bf16.mxu0 %v1015
        %1225 = vmatmul.mubr.bf16.gmra.mxu0 %v1014
        %v1226 = vpop.f32.mrf.mxu0
        %v1227 = vadd.f32 0.0, %v1226
        %v1228 = vpop.f32.mrf.mxu0
        %v1229 = vpop.f32.mrf.mxu0
        %v1230 = vadd.f32 0.0, %v1229
        %v1231 = vpop.f32.mrf.mxu0
        %1232 = vmatprep.mubr.bf16.mxu0 %v1017
        %1233 = vmatmul.mubr.bf16.gmra.mxu0 %v1016
        %v1234 = vpop.f32.mrf.mxu0
        %v1235 = vadd.f32 0.0, %v1234
        %v1236 = vpop.f32.mrf.mxu0
        %v1237 = vpop.f32.mrf.mxu0
        %v1238 = vadd.f32 0.0, %v1237
        %v1239 = vpop.f32.mrf.mxu0
        %1240 = vmatprep.mubr.bf16.mxu0 %v1019
        %1241 = vmatmul.mubr.bf16.gmra.mxu0 %v1018
        %v1242 = vpop.f32.mrf.mxu0
        %v1243 = vadd.f32 0.0, %v1242
        %v1244 = vpop.f32.mrf.mxu0
        %v1245 = vpop.f32.mrf.mxu0
        %v1246 = vadd.f32 0.0, %v1245
        %v1247 = vpop.f32.mrf.mxu0
        %1248 = vmatprep.mubr.bf16.mxu0 %v1021
        %1249 = vmatmul.mubr.bf16.gmra.mxu0 %v1020
        %v1250 = vpop.f32.mrf.mxu0
        %v1251 = vadd.f32 0.0, %v1250
        %v1252 = vpop.f32.mrf.mxu0
        %v1253 = vpop.f32.mrf.mxu0
        %v1254 = vadd.f32 0.0, %v1253
        %v1255 = vpop.f32.mrf.mxu0
        %1256 = vmatprep.mubr.bf16.mxu0 %v1023
        %1257 = vmatmul.mubr.bf16.gmra.mxu0 %v1022
        %v1258 = vpop.f32.mrf.mxu0
        %v1259 = vadd.f32 0.0, %v1258
        %v1260 = vpop.f32.mrf.mxu0
        %v1261 = vpop.f32.mrf.mxu0
        %v1262 = vadd.f32 0.0, %v1261
        %v1263 = vpop.f32.mrf.mxu0
        %1264 = vmatprep.mubr.bf16.mxu0 %v1025
        %1265 = vmatmul.mubr.bf16.gmra.mxu0 %v1024
        %v1266 = vpop.f32.mrf.mxu0
        %v1267 = vadd.f32 0.0, %v1266
        %v1268 = vpop.f32.mrf.mxu0
        %v1269 = vpop.f32.mrf.mxu0
        %v1270 = vadd.f32 0.0, %v1269
        %v1271 = vpop.f32.mrf.mxu0
        %1272 = vmatprep.mubr.bf16.mxu0 %v1027
        %1273 = vmatmul.mubr.bf16.gmra.mxu0 %v1026
        %v1274 = vpop.f32.mrf.mxu0
        %v1275 = vadd.f32 0.0, %v1274
        %v1276 = vpop.f32.mrf.mxu0
        %v1277 = vpop.f32.mrf.mxu0
        %v1278 = vadd.f32 0.0, %v1277
        %v1279 = vpop.f32.mrf.mxu0
        %1280 = vmatprep.mubr.bf16.mxu0 %v1029
        %1281 = vmatmul.mubr.bf16.gmra.mxu0 %v1028
        %v1282 = vpop.f32.mrf.mxu0
        %v1283 = vadd.f32 0.0, %v1282
        %v1284 = vpop.f32.mrf.mxu0
        %v1285 = vpop.f32.mrf.mxu0
        %v1286 = vadd.f32 0.0, %v1285
        %v1287 = vpop.f32.mrf.mxu0
        %1288 = vmatprep.mubr.bf16.mxu0 %v1031
        %1289 = vmatmul.mubr.bf16.gmra.mxu0 %v1030
        %v1290 = vpop.f32.mrf.mxu0
        %v1291 = vadd.f32 0.0, %v1290
        %v1292 = vpop.f32.mrf.mxu0
        %v1293 = vpop.f32.mrf.mxu0
        %v1294 = vadd.f32 0.0, %v1293
        %v1295 = vpop.f32.mrf.mxu0
        %1296 = vmatprep.mubr.bf16.mxu0 %v1033
        %1297 = vmatmul.mubr.bf16.gmra.mxu0 %v1032
        %v1298 = vpop.f32.mrf.mxu0
        %v1299 = vadd.f32 0.0, %v1298
        %v1300 = vpop.f32.mrf.mxu0
        %v1301 = vpop.f32.mrf.mxu0
        %v1302 = vadd.f32 0.0, %v1301
        %v1303 = vpop.f32.mrf.mxu0
        %1304 = vmatprep.mubr.bf16.mxu0 %v1035
        %1305 = vmatmul.mubr.bf16.gmra.mxu0 %v1034
        %v1306 = vpop.f32.mrf.mxu0
        %v1307 = vadd.f32 0.0, %v1306
        %v1308 = vpop.f32.mrf.mxu0
        %v1309 = vpop.f32.mrf.mxu0
        %v1310 = vadd.f32 0.0, %v1309
        %v1311 = vpop.f32.mrf.mxu0
        %1312 = vmatprep.mubr.bf16.mxu0 %v1037
        %1313 = vmatmul.mubr.bf16.gmra.mxu0 %v1036
        %v1314 = vpop.f32.mrf.mxu0
        %v1315 = vadd.f32 0.0, %v1314
        %v1316 = vpop.f32.mrf.mxu0
        %v1317 = vpop.f32.mrf.mxu0
        %v1318 = vadd.f32 0.0, %v1317
        %v1319 = vpop.f32.mrf.mxu0
        %1320 = vmatprep.mubr.bf16.mxu0 %v1039
        %1321 = vmatmul.mubr.bf16.gmra.mxu0 %v1038
        %v1322 = vpop.f32.mrf.mxu0
        %v1323 = vadd.f32 0.0, %v1322
        %v1324 = vpop.f32.mrf.mxu0
        %v1325 = vpop.f32.mrf.mxu0
        %v1326 = vadd.f32 0.0, %v1325
        %v1327 = vpop.f32.mrf.mxu0
        %1328 = vdwg.mxu0
        %p1329 = scmp.lt.s32.totalorder %s26, 2
        // Predicated region
        $region54: #{tpu_custom_call.1} parent=31 // pred_check
          %p1330 = pneg %p1329
        $region55: #{tpu_custom_call.1} parent=31 // pred_check_branch
          %1332 = sbr.rel (%p1330) target = $region57
        $region56: #{tpu_custom_call.1} parent=31 // pred_region
          %v1333 = vld [vmem:[%s234] sm:$0x1]
          %v1335 = vlaneseq
          %v1336 = vshrl.u32 %v1335, 7
          %v1337 = vsub.s32 0, %v1336
          %v1338 = vrot.slane %v1333, %v1337
          %v1340 = vadd.f32 %v1203, %v1338
          %v1341 = vadd.f32 %v1206, %v1338
          %v1342 = vadd.f32 %v1211, %v1338
          %v1343 = vadd.f32 %v1214, %v1338
          %v1344 = vadd.f32 %v1219, %v1338
          %v1345 = vadd.f32 %v1222, %v1338
          %v1346 = vadd.f32 %v1227, %v1338
          %v1347 = vadd.f32 %v1230, %v1338
          %v1348 = vadd.f32 %v1235, %v1338
          %v1349 = vadd.f32 %v1238, %v1338
          %v1350 = vadd.f32 %v1243, %v1338
          %v1351 = vadd.f32 %v1246, %v1338
          %v1352 = vadd.f32 %v1251, %v1338
          %v1353 = vadd.f32 %v1254, %v1338
          %v1354 = vadd.f32 %v1259, %v1338
          %v1355 = vadd.f32 %v1262, %v1338
          %v1356 = vadd.f32 %v1267, %v1338
          %v1357 = vadd.f32 %v1270, %v1338
          %v1358 = vadd.f32 %v1275, %v1338
          %v1359 = vadd.f32 %v1278, %v1338
          %v1360 = vadd.f32 %v1283, %v1338
          %v1361 = vadd.f32 %v1286, %v1338
          %v1362 = vadd.f32 %v1291, %v1338
          %v1363 = vadd.f32 %v1294, %v1338
          %v1364 = vadd.f32 %v1299, %v1338
          %v1365 = vadd.f32 %v1302, %v1338
          %v1366 = vadd.f32 %v1307, %v1338
          %v1367 = vadd.f32 %v1310, %v1338
          %v1368 = vadd.f32 %v1315, %v1338
          %v1369 = vadd.f32 %v1318, %v1338
          %v1370 = vadd.f32 %v1323, %v1338
          %v1371 = vadd.f32 %v1326, %v1338
          %v1372 = vmax.f32 %v1340, 0.0
          %v1373 = vmax.f32 %v1341, 0.0
          %v1374 = vmax.f32 %v1342, 0.0
          %v1375 = vmax.f32 %v1343, 0.0
          %v1376 = vmax.f32 %v1344, 0.0
          %v1377 = vmax.f32 %v1345, 0.0
          %v1378 = vmax.f32 %v1346, 0.0
          %v1379 = vmax.f32 %v1347, 0.0
          %v1380 = vmax.f32 %v1348, 0.0
          %v1381 = vmax.f32 %v1349, 0.0
          %v1382 = vmax.f32 %v1350, 0.0
          %v1383 = vmax.f32 %v1351, 0.0
          %v1384 = vmax.f32 %v1352, 0.0
          %v1385 = vmax.f32 %v1353, 0.0
          %v1386 = vmax.f32 %v1354, 0.0
          %v1387 = vmax.f32 %v1355, 0.0
          %v1388 = vmax.f32 %v1356, 0.0
          %v1389 = vmax.f32 %v1357, 0.0
          %v1390 = vmax.f32 %v1358, 0.0
          %v1391 = vmax.f32 %v1359, 0.0
          %v1392 = vmax.f32 %v1360, 0.0
          %v1393 = vmax.f32 %v1361, 0.0
          %v1394 = vmax.f32 %v1362, 0.0
          %v1395 = vmax.f32 %v1363, 0.0
          %v1396 = vmax.f32 %v1364, 0.0
          %v1397 = vmax.f32 %v1365, 0.0
          %v1398 = vmax.f32 %v1366, 0.0
          %v1399 = vmax.f32 %v1367, 0.0
          %v1400 = vmax.f32 %v1368, 0.0
          %v1401 = vmax.f32 %v1369, 0.0
          %v1402 = vmax.f32 %v1370, 0.0
          %v1403 = vmax.f32 %v1371, 0.0
          %v1404 = vpack.c.bf16 %v1373, %v1372
          %v1405 = vpack.c.bf16 %v1375, %v1374
          %v1406 = vpack.c.bf16 %v1377, %v1376
          %v1407 = vpack.c.bf16 %v1379, %v1378
          %v1408 = vpack.c.bf16 %v1381, %v1380
          %v1409 = vpack.c.bf16 %v1383, %v1382
          %v1410 = vpack.c.bf16 %v1385, %v1384
          %v1411 = vpack.c.bf16 %v1387, %v1386
          %v1412 = vpack.c.bf16 %v1389, %v1388
          %v1413 = vpack.c.bf16 %v1391, %v1390
          %v1414 = vpack.c.bf16 %v1393, %v1392
          %v1415 = vpack.c.bf16 %v1395, %v1394
          %v1416 = vpack.c.bf16 %v1397, %v1396
          %v1417 = vpack.c.bf16 %v1399, %v1398
          %v1418 = vpack.c.bf16 %v1401, %v1400
          %v1419 = vpack.c.bf16 %v1403, %v1402
          %v1436 = vunpack.c.l.b16 %v1404
          %v1437 = vunpack.c.h.b16 %v1404
          %v1438 = vunpack.c.l.b16 %v1405
          %v1439 = vunpack.c.h.b16 %v1405
          %v1440 = vunpack.c.l.b16 %v1406
          %v1441 = vunpack.c.h.b16 %v1406
          %v1442 = vunpack.c.l.b16 %v1407
          %v1443 = vunpack.c.h.b16 %v1407
          %v1444 = vunpack.c.l.b16 %v1408
          %v1445 = vunpack.c.h.b16 %v1408
          %v1446 = vunpack.c.l.b16 %v1409
          %v1447 = vunpack.c.h.b16 %v1409
          %v1448 = vunpack.c.l.b16 %v1410
          %v1449 = vunpack.c.h.b16 %v1410
          %v1450 = vunpack.c.l.b16 %v1411
          %v1451 = vunpack.c.h.b16 %v1411
          %v1452 = vunpack.c.l.b16 %v1412
          %v1453 = vunpack.c.h.b16 %v1412
          %v1454 = vunpack.c.l.b16 %v1413
          %v1455 = vunpack.c.h.b16 %v1413
          %v1456 = vunpack.c.l.b16 %v1414
          %v1457 = vunpack.c.h.b16 %v1414
          %v1458 = vunpack.c.l.b16 %v1415
          %v1459 = vunpack.c.h.b16 %v1415
          %v1460 = vunpack.c.l.b16 %v1416
          %v1461 = vunpack.c.h.b16 %v1416
          %v1462 = vunpack.c.l.b16 %v1417
          %v1463 = vunpack.c.h.b16 %v1417
          %v1464 = vunpack.c.l.b16 %v1418
          %v1465 = vunpack.c.h.b16 %v1418
          %v1466 = vunpack.c.l.b16 %v1419
          %v1467 = vunpack.c.h.b16 %v1419
          %v1468 = vpack.c.b16 %v1436, %v1436
          %v1469 = vpack.c.b16 %v1437, %v1437
          %v1470 = vpack.c.b16 %v1438, %v1438
          %v1471 = vpack.c.b16 %v1439, %v1439
          %v1472 = vpack.c.b16 %v1440, %v1440
          %v1473 = vpack.c.b16 %v1441, %v1441
          %v1474 = vpack.c.b16 %v1442, %v1442
          %v1475 = vpack.c.b16 %v1443, %v1443
          %v1476 = vpack.c.b16 %v1444, %v1444
          %v1477 = vpack.c.b16 %v1445, %v1445
          %v1478 = vpack.c.b16 %v1446, %v1446
          %v1479 = vpack.c.b16 %v1447, %v1447
          %v1480 = vpack.c.b16 %v1448, %v1448
          %v1481 = vpack.c.b16 %v1449, %v1449
          %v1482 = vpack.c.b16 %v1450, %v1450
          %v1483 = vpack.c.b16 %v1451, %v1451
          %v1484 = vpack.c.b16 %v1452, %v1452
          %v1485 = vpack.c.b16 %v1453, %v1453
          %v1486 = vpack.c.b16 %v1454, %v1454
          %v1487 = vpack.c.b16 %v1455, %v1455
          %v1488 = vpack.c.b16 %v1456, %v1456
          %v1489 = vpack.c.b16 %v1457, %v1457
          %v1490 = vpack.c.b16 %v1458, %v1458
          %v1491 = vpack.c.b16 %v1459, %v1459
          %v1492 = vpack.c.b16 %v1460, %v1460
          %v1493 = vpack.c.b16 %v1461, %v1461
          %v1494 = vpack.c.b16 %v1462, %v1462
          %v1495 = vpack.c.b16 %v1463, %v1463
          %v1496 = vpack.c.b16 %v1464, %v1464
          %v1497 = vpack.c.b16 %v1465, %v1465
          %v1498 = vpack.c.b16 %v1466, %v1466
          %v1499 = vpack.c.b16 %v1467, %v1467
          %s1532 = smul.addr %s843, 4
          %s1533 = scalar_lea.vmem [#allocation4], %s1532
          %1534 = vst [vmem:[%s1533] sm:$0xf] %v1468
          %1535 = vst [vmem:[%s1533 + $0x4] sm:$0xf] %v1469
          %1536 = vst [vmem:[%s1533 + $0x8] sm:$0xf] %v1470
          %1537 = vst [vmem:[%s1533 + $0xc] sm:$0xf] %v1471
          %1538 = vst [vmem:[%s1533 + $0x10] sm:$0xf] %v1472
          %1539 = vst [vmem:[%s1533 + $0x14] sm:$0xf] %v1473
          %1540 = vst [vmem:[%s1533 + $0x18] sm:$0xf] %v1474
          %1541 = vst [vmem:[%s1533 + $0x1c] sm:$0xf] %v1475
          %1542 = vst [vmem:[%s1533 + $0x20] sm:$0xf] %v1476
          %1543 = vst [vmem:[%s1533 + $0x24] sm:$0xf] %v1477
          %1544 = vst [vmem:[%s1533 + $0x28] sm:$0xf] %v1478
          %1545 = vst [vmem:[%s1533 + $0x2c] sm:$0xf] %v1479
          %1546 = vst [vmem:[%s1533 + $0x30] sm:$0xf] %v1480
          %1547 = vst [vmem:[%s1533 + $0x34] sm:$0xf] %v1481
          %1548 = vst [vmem:[%s1533 + $0x38] sm:$0xf] %v1482
          %1549 = vst [vmem:[%s1533 + $0x3c] sm:$0xf] %v1483
          %1550 = vst [vmem:[%s1533 + $0x40] sm:$0xf] %v1484
          %1551 = vst [vmem:[%s1533 + $0x44] sm:$0xf] %v1485
          %1552 = vst [vmem:[%s1533 + $0x48] sm:$0xf] %v1486
          %1553 = vst [vmem:[%s1533 + $0x4c] sm:$0xf] %v1487
          %1554 = vst [vmem:[%s1533 + $0x50] sm:$0xf] %v1488
          %1555 = vst [vmem:[%s1533 + $0x54] sm:$0xf] %v1489
          %1556 = vst [vmem:[%s1533 + $0x58] sm:$0xf] %v1490
          %1557 = vst [vmem:[%s1533 + $0x5c] sm:$0xf] %v1491
          %1558 = vst [vmem:[%s1533 + $0x60] sm:$0xf] %v1492
          %1559 = vst [vmem:[%s1533 + $0x64] sm:$0xf] %v1493
          %1560 = vst [vmem:[%s1533 + $0x68] sm:$0xf] %v1494
          %1561 = vst [vmem:[%s1533 + $0x6c] sm:$0xf] %v1495
          %1562 = vst [vmem:[%s1533 + $0x70] sm:$0xf] %v1496
          %1563 = vst [vmem:[%s1533 + $0x74] sm:$0xf] %v1497
          %1564 = vst [vmem:[%s1533 + $0x78] sm:$0xf] %v1498
          %1565 = vst [vmem:[%s1533 + $0x7c] sm:$0xf] %v1499
        $region57: #{tpu_custom_call.1} parent=31 // pred_fallthru
          _
        %p1566 = scmp.eq.s32.totalorder %s26, 2
        // Predicated region
        $region58: #{tpu_custom_call.1} parent=31 // pred_check
          %p1567 = pneg %p1566
        $region59: #{tpu_custom_call.1} parent=31 // pred_check_branch
          %1569 = sbr.rel (%p1567) target = $region61
        $region60: #{tpu_custom_call.1} parent=31 // pred_region
          %v1570 = vld [vmem:[%s234] sm:$0x1]
          %v1572 = vlaneseq
          %v1573 = vshrl.u32 %v1572, 7
          %v1574 = vsub.s32 0, %v1573
          %v1575 = vrot.slane %v1570, %v1574
          %v1577 = vadd.f32 %v1203, %v1575
          %v1578 = vadd.f32 %v1206, %v1575
          %v1579 = vadd.f32 %v1211, %v1575
          %v1580 = vadd.f32 %v1214, %v1575
          %v1581 = vadd.f32 %v1219, %v1575
          %v1582 = vadd.f32 %v1222, %v1575
          %v1583 = vadd.f32 %v1227, %v1575
          %v1584 = vadd.f32 %v1230, %v1575
          %v1585 = vadd.f32 %v1235, %v1575
          %v1586 = vadd.f32 %v1238, %v1575
          %v1587 = vadd.f32 %v1243, %v1575
          %v1588 = vadd.f32 %v1246, %v1575
          %v1589 = vadd.f32 %v1251, %v1575
          %v1590 = vadd.f32 %v1254, %v1575
          %v1591 = vadd.f32 %v1259, %v1575
          %v1592 = vadd.f32 %v1262, %v1575
          %v1593 = vadd.f32 %v1267, %v1575
          %v1594 = vadd.f32 %v1270, %v1575
          %v1595 = vadd.f32 %v1275, %v1575
          %v1596 = vadd.f32 %v1278, %v1575
          %v1597 = vadd.f32 %v1283, %v1575
          %v1598 = vadd.f32 %v1286, %v1575
          %v1599 = vadd.f32 %v1291, %v1575
          %v1600 = vadd.f32 %v1294, %v1575
          %v1601 = vadd.f32 %v1299, %v1575
          %v1602 = vadd.f32 %v1302, %v1575
          %v1603 = vadd.f32 %v1307, %v1575
          %v1604 = vadd.f32 %v1310, %v1575
          %v1605 = vadd.f32 %v1315, %v1575
          %v1606 = vadd.f32 %v1318, %v1575
          %v1607 = vadd.f32 %v1323, %v1575
          %v1608 = vadd.f32 %v1326, %v1575
          %1609 = vmax.xlane.f32.xlu0 %v1577
          %v1610 = vpop.xlane.xlu0 %1609
          %1611 = vmax.xlane.f32.xlu0 %v1578
          %v1612 = vpop.xlane.xlu0 %1611
          %1613 = vmax.xlane.f32.xlu0 %v1579
          %v1614 = vpop.xlane.xlu0 %1613
          %1615 = vmax.xlane.f32.xlu0 %v1580
          %v1616 = vpop.xlane.xlu0 %1615
          %1617 = vmax.xlane.f32.xlu0 %v1581
          %v1618 = vpop.xlane.xlu0 %1617
          %1619 = vmax.xlane.f32.xlu0 %v1582
          %v1620 = vpop.xlane.xlu0 %1619
          %1621 = vmax.xlane.f32.xlu0 %v1583
          %v1622 = vpop.xlane.xlu0 %1621
          %1623 = vmax.xlane.f32.xlu0 %v1584
          %v1624 = vpop.xlane.xlu0 %1623
          %1625 = vmax.xlane.f32.xlu0 %v1585
          %v1626 = vpop.xlane.xlu0 %1625
          %1627 = vmax.xlane.f32.xlu0 %v1586
          %v1628 = vpop.xlane.xlu0 %1627
          %1629 = vmax.xlane.f32.xlu0 %v1587
          %v1630 = vpop.xlane.xlu0 %1629
          %1631 = vmax.xlane.f32.xlu0 %v1588
          %v1632 = vpop.xlane.xlu0 %1631
          %1633 = vmax.xlane.f32.xlu0 %v1589
          %v1634 = vpop.xlane.xlu0 %1633
          %1635 = vmax.xlane.f32.xlu0 %v1590
          %v1636 = vpop.xlane.xlu0 %1635
          %1637 = vmax.xlane.f32.xlu0 %v1591
          %v1638 = vpop.xlane.xlu0 %1637
          %1639 = vmax.xlane.f32.xlu0 %v1592
          %v1640 = vpop.xlane.xlu0 %1639
          %1641 = vmax.xlane.f32.xlu0 %v1593
          %v1642 = vpop.xlane.xlu0 %1641
          %1643 = vmax.xlane.f32.xlu0 %v1594
          %v1644 = vpop.xlane.xlu0 %1643
          %1645 = vmax.xlane.f32.xlu0 %v1595
          %v1646 = vpop.xlane.xlu0 %1645
          %1647 = vmax.xlane.f32.xlu0 %v1596
          %v1648 = vpop.xlane.xlu0 %1647
          %1649 = vmax.xlane.f32.xlu0 %v1597
          %v1650 = vpop.xlane.xlu0 %1649
          %1651 = vmax.xlane.f32.xlu0 %v1598
          %v1652 = vpop.xlane.xlu0 %1651
          %1653 = vmax.xlane.f32.xlu0 %v1599
          %v1654 = vpop.xlane.xlu0 %1653
          %1655 = vmax.xlane.f32.xlu0 %v1600
          %v1656 = vpop.xlane.xlu0 %1655
          %1657 = vmax.xlane.f32.xlu0 %v1601
          %v1658 = vpop.xlane.xlu0 %1657
          %1659 = vmax.xlane.f32.xlu0 %v1602
          %v1660 = vpop.xlane.xlu0 %1659
          %1661 = vmax.xlane.f32.xlu0 %v1603
          %v1662 = vpop.xlane.xlu0 %1661
          %1663 = vmax.xlane.f32.xlu0 %v1604
          %v1664 = vpop.xlane.xlu0 %1663
          %1665 = vmax.xlane.f32.xlu0 %v1605
          %v1666 = vpop.xlane.xlu0 %1665
          %1667 = vmax.xlane.f32.xlu0 %v1606
          %v1668 = vpop.xlane.xlu0 %1667
          %1669 = vmax.xlane.f32.xlu0 %v1607
          %v1670 = vpop.xlane.xlu0 %1669
          %1671 = vmax.xlane.f32.xlu0 %v1608
          %v1672 = vpop.xlane.xlu0 %1671
          %v1673 = vsub.f32 %v1577, %v1610
          %v1674 = vsub.f32 %v1578, %v1612
          %v1675 = vsub.f32 %v1579, %v1614
          %v1676 = vsub.f32 %v1580, %v1616
          %v1677 = vsub.f32 %v1581, %v1618
          %v1678 = vsub.f32 %v1582, %v1620
          %v1679 = vsub.f32 %v1583, %v1622
          %v1680 = vsub.f32 %v1584, %v1624
          %v1681 = vsub.f32 %v1585, %v1626
          %v1682 = vsub.f32 %v1586, %v1628
          %v1683 = vsub.f32 %v1587, %v1630
          %v1684 = vsub.f32 %v1588, %v1632
          %v1685 = vsub.f32 %v1589, %v1634
          %v1686 = vsub.f32 %v1590, %v1636
          %v1687 = vsub.f32 %v1591, %v1638
          %v1688 = vsub.f32 %v1592, %v1640
          %v1689 = vsub.f32 %v1593, %v1642
          %v1690 = vsub.f32 %v1594, %v1644
          %v1691 = vsub.f32 %v1595, %v1646
          %v1692 = vsub.f32 %v1596, %v1648
          %v1693 = vsub.f32 %v1597, %v1650
          %v1694 = vsub.f32 %v1598, %v1652
          %v1695 = vsub.f32 %v1599, %v1654
          %v1696 = vsub.f32 %v1600, %v1656
          %v1697 = vsub.f32 %v1601, %v1658
          %v1698 = vsub.f32 %v1602, %v1660
          %v1699 = vsub.f32 %v1603, %v1662
          %v1700 = vsub.f32 %v1604, %v1664
          %v1701 = vsub.f32 %v1605, %v1666
          %v1702 = vsub.f32 %v1606, %v1668
          %v1703 = vsub.f32 %v1607, %v1670
          %v1704 = vsub.f32 %v1608, %v1672
          %v1705 = vmul.f32 %v1673, 1.442695
          %v1706 = vpow.pop %v1705
          %v1707 = vmul.f32 %v1674, 1.442695
          %v1708 = vpow.pop %v1707
          %v1709 = vmul.f32 %v1675, 1.442695
          %v1710 = vpow.pop %v1709
          %v1711 = vmul.f32 %v1676, 1.442695
          %v1712 = vpow.pop %v1711
          %v1713 = vmul.f32 %v1677, 1.442695
          %v1714 = vpow.pop %v1713
          %v1715 = vmul.f32 %v1678, 1.442695
          %v1716 = vpow.pop %v1715
          %v1717 = vmul.f32 %v1679, 1.442695
          %v1718 = vpow.pop %v1717
          %v1719 = vmul.f32 %v1680, 1.442695
          %v1720 = vpow.pop %v1719
          %v1721 = vmul.f32 %v1681, 1.442695
          %v1722 = vpow.pop %v1721
          %v1723 = vmul.f32 %v1682, 1.442695
          %v1724 = vpow.pop %v1723
          %v1725 = vmul.f32 %v1683, 1.442695
          %v1726 = vpow.pop %v1725
          %v1727 = vmul.f32 %v1684, 1.442695
          %v1728 = vpow.pop %v1727
          %v1729 = vmul.f32 %v1685, 1.442695
          %v1730 = vpow.pop %v1729
          %v1731 = vmul.f32 %v1686, 1.442695
          %v1732 = vpow.pop %v1731
          %v1733 = vmul.f32 %v1687, 1.442695
          %v1734 = vpow.pop %v1733
          %v1735 = vmul.f32 %v1688, 1.442695
          %v1736 = vpow.pop %v1735
          %v1737 = vmul.f32 %v1689, 1.442695
          %v1738 = vpow.pop %v1737
          %v1739 = vmul.f32 %v1690, 1.442695
          %v1740 = vpow.pop %v1739
          %v1741 = vmul.f32 %v1691, 1.442695
          %v1742 = vpow.pop %v1741
          %v1743 = vmul.f32 %v1692, 1.442695
          %v1744 = vpow.pop %v1743
          %v1745 = vmul.f32 %v1693, 1.442695
          %v1746 = vpow.pop %v1745
          %v1747 = vmul.f32 %v1694, 1.442695
          %v1748 = vpow.pop %v1747
          %v1749 = vmul.f32 %v1695, 1.442695
          %v1750 = vpow.pop %v1749
          %v1751 = vmul.f32 %v1696, 1.442695
          %v1752 = vpow.pop %v1751
          %v1753 = vmul.f32 %v1697, 1.442695
          %v1754 = vpow.pop %v1753
          %v1755 = vmul.f32 %v1698, 1.442695
          %v1756 = vpow.pop %v1755
          %v1757 = vmul.f32 %v1699, 1.442695
          %v1758 = vpow.pop %v1757
          %v1759 = vmul.f32 %v1700, 1.442695
          %v1760 = vpow.pop %v1759
          %v1761 = vmul.f32 %v1701, 1.442695
          %v1762 = vpow.pop %v1761
          %v1763 = vmul.f32 %v1702, 1.442695
          %v1764 = vpow.pop %v1763
          %v1765 = vmul.f32 %v1703, 1.442695
          %v1766 = vpow.pop %v1765
          %v1767 = vmul.f32 %v1704, 1.442695
          %v1768 = vpow.pop %v1767
          %1769 = vadd.xlane.f32.xlu0 %v1706
          %v1770 = vpop.xlane.xlu0 %1769
          %1771 = vadd.xlane.f32.xlu0 %v1708
          %v1772 = vpop.xlane.xlu0 %1771
          %1773 = vadd.xlane.f32.xlu0 %v1710
          %v1774 = vpop.xlane.xlu0 %1773
          %1775 = vadd.xlane.f32.xlu0 %v1712
          %v1776 = vpop.xlane.xlu0 %1775
          %1777 = vadd.xlane.f32.xlu0 %v1714
          %v1778 = vpop.xlane.xlu0 %1777
          %1779 = vadd.xlane.f32.xlu0 %v1716
          %v1780 = vpop.xlane.xlu0 %1779
          %1781 = vadd.xlane.f32.xlu0 %v1718
          %v1782 = vpop.xlane.xlu0 %1781
          %1783 = vadd.xlane.f32.xlu0 %v1720
          %v1784 = vpop.xlane.xlu0 %1783
          %1785 = vadd.xlane.f32.xlu0 %v1722
          %v1786 = vpop.xlane.xlu0 %1785
          %1787 = vadd.xlane.f32.xlu0 %v1724
          %v1788 = vpop.xlane.xlu0 %1787
          %1789 = vadd.xlane.f32.xlu0 %v1726
          %v1790 = vpop.xlane.xlu0 %1789
          %1791 = vadd.xlane.f32.xlu0 %v1728
          %v1792 = vpop.xlane.xlu0 %1791
          %1793 = vadd.xlane.f32.xlu0 %v1730
          %v1794 = vpop.xlane.xlu0 %1793
          %1795 = vadd.xlane.f32.xlu0 %v1732
          %v1796 = vpop.xlane.xlu0 %1795
          %1797 = vadd.xlane.f32.xlu0 %v1734
          %v1798 = vpop.xlane.xlu0 %1797
          %1799 = vadd.xlane.f32.xlu0 %v1736
          %v1800 = vpop.xlane.xlu0 %1799
          %1801 = vadd.xlane.f32.xlu0 %v1738
          %v1802 = vpop.xlane.xlu0 %1801
          %1803 = vadd.xlane.f32.xlu0 %v1740
          %v1804 = vpop.xlane.xlu0 %1803
          %1805 = vadd.xlane.f32.xlu0 %v1742
          %v1806 = vpop.xlane.xlu0 %1805
          %1807 = vadd.xlane.f32.xlu0 %v1744
          %v1808 = vpop.xlane.xlu0 %1807
          %1809 = vadd.xlane.f32.xlu0 %v1746
          %v1810 = vpop.xlane.xlu0 %1809
          %1811 = vadd.xlane.f32.xlu0 %v1748
          %v1812 = vpop.xlane.xlu0 %1811
          %1813 = vadd.xlane.f32.xlu0 %v1750
          %v1814 = vpop.xlane.xlu0 %1813
          %1815 = vadd.xlane.f32.xlu0 %v1752
          %v1816 = vpop.xlane.xlu0 %1815
          %1817 = vadd.xlane.f32.xlu0 %v1754
          %v1818 = vpop.xlane.xlu0 %1817
          %1819 = vadd.xlane.f32.xlu0 %v1756
          %v1820 = vpop.xlane.xlu0 %1819
          %1821 = vadd.xlane.f32.xlu0 %v1758
          %v1822 = vpop.xlane.xlu0 %1821
          %1823 = vadd.xlane.f32.xlu0 %v1760
          %v1824 = vpop.xlane.xlu0 %1823
          %1825 = vadd.xlane.f32.xlu0 %v1762
          %v1826 = vpop.xlane.xlu0 %1825
          %1827 = vadd.xlane.f32.xlu0 %v1764
          %v1828 = vpop.xlane.xlu0 %1827
          %1829 = vadd.xlane.f32.xlu0 %v1766
          %v1830 = vpop.xlane.xlu0 %1829
          %1831 = vadd.xlane.f32.xlu0 %v1768
          %v1832 = vpop.xlane.xlu0 %1831
          %v1833 = vlog2.pop %v1770
          %v1834 = vmul.f32 %v1833, 0.6931472
          %v1835 = vlog2.pop %v1772
          %v1836 = vmul.f32 %v1835, 0.6931472
          %v1837 = vlog2.pop %v1774
          %v1838 = vmul.f32 %v1837, 0.6931472
          %v1839 = vlog2.pop %v1776
          %v1840 = vmul.f32 %v1839, 0.6931472
          %v1841 = vlog2.pop %v1778
          %v1842 = vmul.f32 %v1841, 0.6931472
          %v1843 = vlog2.pop %v1780
          %v1844 = vmul.f32 %v1843, 0.6931472
          %v1845 = vlog2.pop %v1782
          %v1846 = vmul.f32 %v1845, 0.6931472
          %v1847 = vlog2.pop %v1784
          %v1848 = vmul.f32 %v1847, 0.6931472
          %v1849 = vlog2.pop %v1786
          %v1850 = vmul.f32 %v1849, 0.6931472
          %v1851 = vlog2.pop %v1788
          %v1852 = vmul.f32 %v1851, 0.6931472
          %v1853 = vlog2.pop %v1790
          %v1854 = vmul.f32 %v1853, 0.6931472
          %v1855 = vlog2.pop %v1792
          %v1856 = vmul.f32 %v1855, 0.6931472
          %v1857 = vlog2.pop %v1794
          %v1858 = vmul.f32 %v1857, 0.6931472
          %v1859 = vlog2.pop %v1796
          %v1860 = vmul.f32 %v1859, 0.6931472
          %v1861 = vlog2.pop %v1798
          %v1862 = vmul.f32 %v1861, 0.6931472
          %v1863 = vlog2.pop %v1800
          %v1864 = vmul.f32 %v1863, 0.6931472
          %v1865 = vlog2.pop %v1802
          %v1866 = vmul.f32 %v1865, 0.6931472
          %v1867 = vlog2.pop %v1804
          %v1868 = vmul.f32 %v1867, 0.6931472
          %v1869 = vlog2.pop %v1806
          %v1870 = vmul.f32 %v1869, 0.6931472
          %v1871 = vlog2.pop %v1808
          %v1872 = vmul.f32 %v1871, 0.6931472
          %v1873 = vlog2.pop %v1810
          %v1874 = vmul.f32 %v1873, 0.6931472
          %v1875 = vlog2.pop %v1812
          %v1876 = vmul.f32 %v1875, 0.6931472
          %v1877 = vlog2.pop %v1814
          %v1878 = vmul.f32 %v1877, 0.6931472
          %v1879 = vlog2.pop %v1816
          %v1880 = vmul.f32 %v1879, 0.6931472
          %v1881 = vlog2.pop %v1818
          %v1882 = vmul.f32 %v1881, 0.6931472
          %v1883 = vlog2.pop %v1820
          %v1884 = vmul.f32 %v1883, 0.6931472
          %v1885 = vlog2.pop %v1822
          %v1886 = vmul.f32 %v1885, 0.6931472
          %v1887 = vlog2.pop %v1824
          %v1888 = vmul.f32 %v1887, 0.6931472
          %v1889 = vlog2.pop %v1826
          %v1890 = vmul.f32 %v1889, 0.6931472
          %v1891 = vlog2.pop %v1828
          %v1892 = vmul.f32 %v1891, 0.6931472
          %v1893 = vlog2.pop %v1830
          %v1894 = vmul.f32 %v1893, 0.6931472
          %v1895 = vlog2.pop %v1832
          %v1896 = vmul.f32 %v1895, 0.6931472
          %v1897 = vsub.f32 %v1673, %v1834
          %v1898 = vsub.f32 %v1674, %v1836
          %v1899 = vsub.f32 %v1675, %v1838
          %v1900 = vsub.f32 %v1676, %v1840
          %v1901 = vsub.f32 %v1677, %v1842
          %v1902 = vsub.f32 %v1678, %v1844
          %v1903 = vsub.f32 %v1679, %v1846
          %v1904 = vsub.f32 %v1680, %v1848
          %v1905 = vsub.f32 %v1681, %v1850
          %v1906 = vsub.f32 %v1682, %v1852
          %v1907 = vsub.f32 %v1683, %v1854
          %v1908 = vsub.f32 %v1684, %v1856
          %v1909 = vsub.f32 %v1685, %v1858
          %v1910 = vsub.f32 %v1686, %v1860
          %v1911 = vsub.f32 %v1687, %v1862
          %v1912 = vsub.f32 %v1688, %v1864
          %v1913 = vsub.f32 %v1689, %v1866
          %v1914 = vsub.f32 %v1690, %v1868
          %v1915 = vsub.f32 %v1691, %v1870
          %v1916 = vsub.f32 %v1692, %v1872
          %v1917 = vsub.f32 %v1693, %v1874
          %v1918 = vsub.f32 %v1694, %v1876
          %v1919 = vsub.f32 %v1695, %v1878
          %v1920 = vsub.f32 %v1696, %v1880
          %v1921 = vsub.f32 %v1697, %v1882
          %v1922 = vsub.f32 %v1698, %v1884
          %v1923 = vsub.f32 %v1699, %v1886
          %v1924 = vsub.f32 %v1700, %v1888
          %v1925 = vsub.f32 %v1701, %v1890
          %v1926 = vsub.f32 %v1702, %v1892
          %v1927 = vsub.f32 %v1703, %v1894
          %v1928 = vsub.f32 %v1704, %v1896
          %1929 = vst [vmem:[%s231] sm:$0xff] %v1897
          %1930 = vst [vmem:[%s231 + $0x8] sm:$0xff] %v1898
          %1931 = vst [vmem:[%s231 + $0x10] sm:$0xff] %v1899
          %1932 = vst [vmem:[%s231 + $0x18] sm:$0xff] %v1900
          %1933 = vst [vmem:[%s231 + $0x20] sm:$0xff] %v1901
          %1934 = vst [vmem:[%s231 + $0x28] sm:$0xff] %v1902
          %1935 = vst [vmem:[%s231 + $0x30] sm:$0xff] %v1903
          %1936 = vst [vmem:[%s231 + $0x38] sm:$0xff] %v1904
          %1937 = vst [vmem:[%s231 + $0x40] sm:$0xff] %v1905
          %1938 = vst [vmem:[%s231 + $0x48] sm:$0xff] %v1906
          %1939 = vst [vmem:[%s231 + $0x50] sm:$0xff] %v1907
          %1940 = vst [vmem:[%s231 + $0x58] sm:$0xff] %v1908
          %1941 = vst [vmem:[%s231 + $0x60] sm:$0xff] %v1909
          %1942 = vst [vmem:[%s231 + $0x68] sm:$0xff] %v1910
          %1943 = vst [vmem:[%s231 + $0x70] sm:$0xff] %v1911
          %1944 = vst [vmem:[%s231 + $0x78] sm:$0xff] %v1912
          %1945 = vst [vmem:[%s231 + $0x80] sm:$0xff] %v1913
          %1946 = vst [vmem:[%s231 + $0x88] sm:$0xff] %v1914
          %1947 = vst [vmem:[%s231 + $0x90] sm:$0xff] %v1915
          %1948 = vst [vmem:[%s231 + $0x98] sm:$0xff] %v1916
          %1949 = vst [vmem:[%s231 + $0xa0] sm:$0xff] %v1917
          %1950 = vst [vmem:[%s231 + $0xa8] sm:$0xff] %v1918
          %1951 = vst [vmem:[%s231 + $0xb0] sm:$0xff] %v1919
          %1952 = vst [vmem:[%s231 + $0xb8] sm:$0xff] %v1920
          %1953 = vst [vmem:[%s231 + $0xc0] sm:$0xff] %v1921
          %1954 = vst [vmem:[%s231 + $0xc8] sm:$0xff] %v1922
          %1955 = vst [vmem:[%s231 + $0xd0] sm:$0xff] %v1923
          %1956 = vst [vmem:[%s231 + $0xd8] sm:$0xff] %v1924
          %1957 = vst [vmem:[%s231 + $0xe0] sm:$0xff] %v1925
          %1958 = vst [vmem:[%s231 + $0xe8] sm:$0xff] %v1926
          %1959 = vst [vmem:[%s231 + $0xf0] sm:$0xff] %v1927
          %1960 = vst [vmem:[%s231 + $0xf8] sm:$0xff] %v1928
        $region61: #{tpu_custom_call.1} parent=31 // pred_fallthru
          _
        %s1961 = sand.u32 %s119, 1
        %s1962 = scalar_lea.sflag [#allocation7], %s1961
        %s1963 = sand.u32 %s119, 1
        %s1964 = smul.addr %s1963, 256
        %s1965 = scalar_lea.vmem [#allocation10], %s1964
        // Predicated region
        $region62: #{tpu_custom_call.1} parent=31 // pred_check
          %p1966 = pneg %p129
        $region63: #{tpu_custom_call.1} parent=31 // pred_check_branch
          %1968 = sbr.rel (%p1966) target = $region65
        $region64: #{tpu_custom_call.1} parent=31 // pred_region
          %p1969 = scmp.eq.s32.totalorder %s26, 2
          %s1970 = scalar_select %p1969, %s27, 0
          %s1971 = smul.u32 32, %s1970
          %s1973 = ssub.s32 4096, 4096
          %1974 = vsyncadd %s1962, %s1973
          %s1975 = smul.addr %s1971, 128
          %s1976 = scalar_lea.hbm %s4, %s1975
          %s1977 = sshll.u32 %s1965, 4
          %s1978 = int_to_ptr.vmem [resolvable:$true] %s1977
          %1983 = dma.vmem_to_hbm [thread:$0]  %s1978, 4096, %s1976, %s1962, 128, 128, 8
        $region65: #{tpu_custom_call.1} parent=31 // pred_fallthru
          _
      $region32: #{tpu_custom_call.1} parent=5 // pred_fallthru
        _
      %p1984 = scmp.le.s32.totalorder 2, %s17
      // Predicated region
      $region66: #{tpu_custom_call.1} parent=5 // pred_check
        %p1985 = pneg %p1984
      $region67: #{tpu_custom_call.1} parent=5 // pred_check_branch
        %1987 = sbr.rel (%p1985) target = $region69
      $region68: #{tpu_custom_call.1} parent=5 // pred_region
        %s1988 = ssub.s32 %s17, 2
        // Predicated region
        $region70: #{tpu_custom_call.1} parent=68 // pred_check
          %p1989 = pneg %p135
        $region71: #{tpu_custom_call.1} parent=68 // pred_check_branch
          %1991 = sbr.rel (%p1989) target = $region73
        $region72: #{tpu_custom_call.1} parent=68 // pred_region
          %s1992 = sand.u32 %s120, 1
          %s1993 = scalar_lea.sflag [#allocation7], %s1992
          %s1994 = sand.u32 %s120, 1
          %s1995 = smul.addr %s1994, 256
          %s1996 = scalar_lea.vmem [#allocation10], %s1995
          %1997 = dma.done %s1993, 4096
        $region73: #{tpu_custom_call.1} parent=68 // pred_fallthru
          _
      $region69: #{tpu_custom_call.1} parent=5 // pred_fallthru
        _
    $region6: #{tpu_custom_call.1} parent=1 // loop_footer
      %s21 = sadd.s32 1, %s17
    $region7: #{tpu_custom_call.1} parent=1 // loop_footer_branch
      %16 = sbr.rel target = $region3
    $region8: #{tpu_custom_call.1} parent=1 // loop_exit
      _
    %1998 = vsyncpa [#allocation6], 1
    %s1999 = scalar_lea.sflag [#allocation6], 1
    %2000 = vsyncpa %s1999, 1
    %2001 = vsyncpa [#allocation9], 1
    %s2002 = scalar_lea.sflag [#allocation9], 1
    %2003 = vsyncpa %s2002, 1
    %2004 = vsyncpa [#allocation7], 1
    %s2005 = scalar_lea.sflag [#allocation7], 1
    %2006 = vsyncpa %s2005, 1

</llo_original>
